<compile_context>
chip_gen: v7x
topology: tpu7x:2x2x1
jax: 0.10.0
libtpu: 0.0.40
codegen_flags: <defaults>
</compile_context>

<pallas_src>
import jax
import jax.numpy as jnp
from jax.experimental import pallas as pl
from jax.experimental.pallas import tpu as pltpu


def _round_up(x, m):
    return (x + m - 1) // m * m


def _pick_batch_tile(b):
    for t in (256, 128, 64, 32, 16, 8):
        if b % t == 0:
            return t
    return b  # tiny / odd batches: single block


def _make_dssm_kernel(tile_b, seq, vpad):
    def kernel(ids1_ref, ids2_ref, emb_ref,
               w1_ref, b1_ref, w2_ref, b2_ref, w3_ref, b3_ref,
               sc1_ref, sh1_ref, sc2_ref, sh2_ref,
               wc1a_ref, wc1b_ref, bc1_ref, wc2_ref, bc2_ref,
               logits_ref, pro_ref):

        def counts_from_ids(ids):
            # bag-of-token counts built on the VPU: counts[b, v] = #{s: ids[b,s]==v}
            vocab_iota = jax.lax.broadcasted_iota(jnp.int32, (tile_b, vpad), 1)
            c = jnp.zeros((tile_b, vpad), jnp.float32)
            for s in range(seq):  # static, small unrolled loop
                c = c + (vocab_iota == ids[:, s:s + 1]).astype(jnp.float32)
            return c

        # Fuse both branches into one M = 2*tile_b matmul chain.
        counts = jnp.concatenate(
            [counts_from_ids(ids1_ref[...]), counts_from_ids(ids2_ref[...])],
            axis=0).astype(jnp.bfloat16)

        # EmbeddingBag(mode='sum') == counts @ embedding_table.
        x = jnp.dot(counts, emb_ref[...], preferred_element_type=jnp.float32)
        h = jnp.tanh(x)
        h = jnp.tanh(jnp.dot(h.astype(jnp.bfloat16), w1_ref[...],
                             preferred_element_type=jnp.float32) + b1_ref[...])
        h = jnp.tanh(jnp.dot(h.astype(jnp.bfloat16), w2_ref[...],
                             preferred_element_type=jnp.float32) + b2_ref[...])
        h = jnp.tanh(jnp.dot(h.astype(jnp.bfloat16), w3_ref[...],
                             preferred_element_type=jnp.float32) + b3_ref[...])

        v1 = h[:tile_b]          # branch 1 embedding
        v2 = h[tile_b:]          # branch 2 embedding

        # BatchNorm1d (eval running stats) folded into per-half scale/shift;
        # the concat is folded into a split wc1 (no [B, 512] VMEM copy).
        n1 = v1 * sc1_ref[...] + sh1_ref[...]
        n2 = v2 * sc2_ref[...] + sh2_ref[...]
        pre = (jnp.dot(n1.astype(jnp.bfloat16), wc1a_ref[...],
                       preferred_element_type=jnp.float32)
               + jnp.dot(n2.astype(jnp.bfloat16), wc1b_ref[...],
                         preferred_element_type=jnp.float32)
               + bc1_ref[...])
        hc = jnp.tanh(pre)
        # TODO(synk): nn.Dropout(p=0.2) is identity here (eval-mode semantics).
        logits = jnp.dot(hc.astype(jnp.bfloat16), wc2_ref[...],
                         preferred_element_type=jnp.float32) + bc2_ref[...]
        logits_ref[...] = logits

        m = jnp.max(logits, axis=-1, keepdims=True)
        ex = jnp.exp(logits - m)
        denom = jnp.sum(ex, axis=-1, keepdims=True)
        pro_ref[...] = ex * pl.reciprocal(denom, approx=True)

    return kernel


def dssm_forward(p1, p2, params):
    B, seq = p1.shape
    vocab_p1, E = params["embedding"].shape          # vocab_size + 1, emb dim
    H1 = params["w1"].shape[1]                        # 300
    H2 = params["w2"].shape[1]                        # 512
    H3 = params["w3"].shape[1]                        # 256
    C = params["wc2"].shape[1]                        # num_classes

    vpad = _round_up(vocab_p1, 128)
    epad = _round_up(E, 128)
    h1pad = _round_up(H1, 128)
    assert H2 % 128 == 0 and H3 % 128 == 0

    tile_b = _pick_batch_tile(B)
    grid = (B // tile_b,)

    bf16 = jnp.bfloat16

    def pad2(a, rows, cols):
        return jnp.pad(a, ((0, rows - a.shape[0]), (0, cols - a.shape[1])))

    # Zero padding keeps the math exact: padded emb rows are never counted,
    # padded w1 cols feed tanh(0)=0 into zero-padded w2 rows.
    emb_p = pad2(params["embedding"], vpad, epad).astype(bf16)
    w1_p = pad2(params["w1"], epad, h1pad).astype(bf16)
    b1_p = jnp.pad(params["b1"], (0, h1pad - H1)).reshape(1, -1)
    w2_p = pad2(params["w2"], h1pad, H2).astype(bf16)
    b2_p = params["b2"].reshape(1, -1)
    w3_p = params["w3"].astype(bf16)
    b3_p = params["b3"].reshape(1, -1)

    eps = 1e-5
    scale = params["bn_gamma"] / jnp.sqrt(params["bn_var"] + eps)
    shift = params["bn_beta"] - params["bn_mean"] * scale
    sc1, sc2 = scale[:H3].reshape(1, -1), scale[H3:].reshape(1, -1)
    sh1, sh2 = shift[:H3].reshape(1, -1), shift[H3:].reshape(1, -1)

    wc1a = params["wc1"][:H3].astype(bf16)
    wc1b = params["wc1"][H3:].astype(bf16)
    bc1 = params["bc1"].reshape(1, -1)
    wc2 = params["wc2"].astype(bf16)
    bc2 = params["bc2"].reshape(1, -1)

    args = (p1.astype(jnp.int32), p2.astype(jnp.int32), emb_p,
            w1_p, b1_p, w2_p, b2_p, w3_p, b3_p,
            sc1, sh1, sc2, sh2, wc1a, wc1b, bc1, wc2, bc2)

    def const_spec(shape):
        return pl.BlockSpec(shape, lambda i: (0, 0))

    def batch_spec(ncols):
        return pl.BlockSpec((tile_b, ncols), lambda i: (i, 0))

    in_specs = [
        batch_spec(seq),                 # p1 token ids
        batch_spec(seq),                 # p2 token ids
        const_spec((vpad, epad)),        # embedding table (VMEM-resident)
        const_spec((epad, h1pad)), const_spec((1, h1pad)),   # w1, b1
        const_spec((h1pad, H2)), const_spec((1, H2)),        # w2, b2
        const_spec((H2, H3)), const_spec((1, H3)),           # w3, b3
        const_spec((1, H3)), const_spec((1, H3)),            # bn scale/shift (half 1)
        const_spec((1, H3)), const_spec((1, H3)),            # bn scale/shift (half 2)
        const_spec((H3, H3)), const_spec((H3, H3)),          # wc1 split halves
        const_spec((1, H3)),                                 # bc1
        const_spec((H3, C)), const_spec((1, C)),             # wc2, bc2
    ]
    out_specs = (batch_spec(C), batch_spec(C))
    out_shape = (jax.ShapeDtypeStruct((B, C), jnp.float32),
                 jax.ShapeDtypeStruct((B, C), jnp.float32))

    kernel = _make_dssm_kernel(tile_b, seq, vpad)

    return pl.pallas_call(
        kernel,
        out_shape=out_shape,
        grid_spec=pltpu.PrefetchScalarGridSpec(
            num_scalar_prefetch=0,
            grid=grid,
            in_specs=in_specs,
            out_specs=out_specs),
        compiler_params=pltpu.CompilerParams(
            dimension_semantics=("parallel",)),
    )(*args)


def init_params(key, vocab_size, embedding_size, num_classes=2):
    ks = jax.random.split(key, 6)

    def linear(k, fan_in, fan_out):
        limit = (6.0 / (fan_in + fan_out)) ** 0.5  # xavier_uniform
        w = jax.random.uniform(k, (fan_in, fan_out), jnp.float32, -limit, limit)
        b = jnp.zeros((fan_out,), jnp.float32)
        return w, b

    emb = 0.1 * jax.random.normal(ks[0], (vocab_size + 1, embedding_size),
                                  jnp.float32)
    w1, b1 = linear(ks[1], embedding_size, 300)
    w2, b2 = linear(ks[2], 300, 512)
    w3, b3 = linear(ks[3], 512, 256)
    wc1, bc1 = linear(ks[4], 256 * 2, 256)
    wc2, bc2 = linear(ks[5], 256, num_classes)

    return dict(embedding=emb,
                w1=w1, b1=b1, w2=w2, b2=b2, w3=w3, b3=b3,
                wc1=wc1, bc1=bc1, wc2=wc2, bc2=bc2,
                bn_gamma=jnp.ones((512,), jnp.float32),
                bn_beta=jnp.zeros((512,), jnp.float32),
                bn_mean=jnp.zeros((512,), jnp.float32),
                bn_var=jnp.ones((512,), jnp.float32))


def reference_forward(p1, p2, params):
    def embed_sum(p):
        return params["embedding"][p].sum(axis=1)

    def fc(x):
        h = jnp.tanh(x)
        h = jnp.tanh(h @ params["w1"] + params["b1"])
        h = jnp.tanh(h @ params["w2"] + params["b2"])
        h = jnp.tanh(h @ params["w3"] + params["b3"])
        return h

    v1 = fc(embed_sum(p1))
    v2 = fc(embed_sum(p2))
    merged = jnp.concatenate([v1, v2], axis=1)
    eps = 1e-5
    normed = ((merged - params["bn_mean"]) / jnp.sqrt(params["bn_var"] + eps)
              * params["bn_gamma"] + params["bn_beta"])
    h = jnp.tanh(normed @ params["wc1"] + params["bc1"])
    logits = h @ params["wc2"] + params["bc2"]
    return logits, jax.nn.softmax(logits, axis=-1)


if __name__ == "__main__":
    key = jax.random.PRNGKey(0)
    vocab_size = 50
    embedding_size = 32
    num_classes = 2
    batch, seq = 8, 8

    kp, k1, k2 = jax.random.split(key, 3)
    params = init_params(kp, vocab_size, embedding_size, num_classes)
    p1 = jax.random.randint(k1, (batch, seq), 0, vocab_size + 1, dtype=jnp.int32)
    p2 = jax.random.randint(k2, (batch, seq), 0, vocab_size + 1, dtype=jnp.int32)

    logits, pro = dssm_forward(p1, p2, params)
    jax.block_until_ready((logits, pro))

    ref_logits, ref_pro = reference_forward(p1, p2, params)
    # bf16 weights/activations -> looser tolerance than the all-f32 version.
    assert jnp.allclose(logits, ref_logits, atol=3e-2, rtol=3e-2)
    assert jnp.allclose(pro, ref_pro, atol=3e-2, rtol=3e-2)
    assert logits.shape == (batch, num_classes) and pro.shape == (batch, num_classes)

    print("KERNEL_OK")
</pallas_src>

<mosaic_0001>
module attributes {stable_mosaic.version = 11 : i64} {
  func.func @kernel(%arg0: i32, %arg1: memref<8x8xi32, #tpu.memory_space<vmem>>, %arg2: memref<8x8xi32, #tpu.memory_space<vmem>>, %arg3: memref<128x128xbf16, #tpu.memory_space<vmem>>, %arg4: memref<128x384xbf16, #tpu.memory_space<vmem>>, %arg5: memref<1x384xf32, #tpu.memory_space<vmem>>, %arg6: memref<384x512xbf16, #tpu.memory_space<vmem>>, %arg7: memref<1x512xf32, #tpu.memory_space<vmem>>, %arg8: memref<512x256xbf16, #tpu.memory_space<vmem>>, %arg9: memref<1x256xf32, #tpu.memory_space<vmem>>, %arg10: memref<1x256xf32, #tpu.memory_space<vmem>>, %arg11: memref<1x256xf32, #tpu.memory_space<vmem>>, %arg12: memref<1x256xf32, #tpu.memory_space<vmem>>, %arg13: memref<1x256xf32, #tpu.memory_space<vmem>>, %arg14: memref<256x256xbf16, #tpu.memory_space<vmem>>, %arg15: memref<256x256xbf16, #tpu.memory_space<vmem>>, %arg16: memref<1x256xf32, #tpu.memory_space<vmem>>, %arg17: memref<256x2xbf16, #tpu.memory_space<vmem>>, %arg18: memref<1x2xf32, #tpu.memory_space<vmem>>, %arg19: memref<8x2xf32, #tpu.memory_space<vmem>>, %arg20: memref<8x2xf32, #tpu.memory_space<vmem>>) attributes {dimension_semantics = [#tpu.dimension_semantics<parallel>], iteration_bounds = array<i64: 1>, scalar_prefetch = 0 : i64, scratch_operands = 0 : i64, tpu.core_type = #tpu.core_type<tc>, window_params = [{transform_indices = @transform_0, window_bounds = array<i64: 8, 8>}, {transform_indices = @transform_1, window_bounds = array<i64: 8, 8>}, {pipeline_mode = #tpu.pipeline_mode<synchronous>, transform_indices = @transform_2, window_bounds = array<i64: 128, 128>}, {pipeline_mode = #tpu.pipeline_mode<synchronous>, transform_indices = @transform_3, window_bounds = array<i64: 128, 384>}, {pipeline_mode = #tpu.pipeline_mode<synchronous>, transform_indices = @transform_4, window_bounds = array<i64: 1, 384>}, {pipeline_mode = #tpu.pipeline_mode<synchronous>, transform_indices = @transform_5, window_bounds = array<i64: 384, 512>}, {pipeline_mode = #tpu.pipeline_mode<synchronous>, transform_indices = @transform_6, window_bounds = array<i64: 1, 512>}, {pipeline_mode = #tpu.pipeline_mode<synchronous>, transform_indices = @transform_7, window_bounds = array<i64: 512, 256>}, {pipeline_mode = #tpu.pipeline_mode<synchronous>, transform_indices = @transform_8, window_bounds = array<i64: 1, 256>}, {pipeline_mode = #tpu.pipeline_mode<synchronous>, transform_indices = @transform_9, window_bounds = array<i64: 1, 256>}, {pipeline_mode = #tpu.pipeline_mode<synchronous>, transform_indices = @transform_10, window_bounds = array<i64: 1, 256>}, {pipeline_mode = #tpu.pipeline_mode<synchronous>, transform_indices = @transform_11, window_bounds = array<i64: 1, 256>}, {pipeline_mode = #tpu.pipeline_mode<synchronous>, transform_indices = @transform_12, window_bounds = array<i64: 1, 256>}, {pipeline_mode = #tpu.pipeline_mode<synchronous>, transform_indices = @transform_13, window_bounds = array<i64: 256, 256>}, {pipeline_mode = #tpu.pipeline_mode<synchronous>, transform_indices = @transform_14, window_bounds = array<i64: 256, 256>}, {pipeline_mode = #tpu.pipeline_mode<synchronous>, transform_indices = @transform_15, window_bounds = array<i64: 1, 256>}, {pipeline_mode = #tpu.pipeline_mode<synchronous>, transform_indices = @transform_16, window_bounds = array<i64: 256, 2>}, {pipeline_mode = #tpu.pipeline_mode<synchronous>, transform_indices = @transform_17, window_bounds = array<i64: 1, 2>}, {transform_indices = @transform_18, window_bounds = array<i64: 8, 2>}, {transform_indices = @transform_19, window_bounds = array<i64: 8, 2>}]} {
    %c0 = arith.constant 0 : index
    %c0_0 = arith.constant 0 : index
    %0 = vector.load %arg1[%c0, %c0_0] : memref<8x8xi32, #tpu.memory_space<vmem>>, vector<8x8xi32>
    %1 = tpu.iota {dimensions = array<i32: 1>} : vector<8x128xi32>
    %cst = arith.constant 0.000000e+00 : f32
    %2 = vector.broadcast %cst : f32 to vector<8x128xf32>
    %3 = vector.extract_strided_slice %0 {offsets = [0, 0], sizes = [8, 1], strides = [1, 1]} : vector<8x8xi32> to vector<8x1xi32>
    %4 = vector.broadcast %3 : vector<8x1xi32> to vector<8x128xi32>
    %5 = arith.cmpi eq, %1, %4 : vector<8x128xi32>
    %6 = arith.extui %5 : vector<8x128xi1> to vector<8x128xi32>
    %7 = arith.sitofp %6 : vector<8x128xi32> to vector<8x128xf32>
    %8 = arith.addf %2, %7 : vector<8x128xf32>
    %9 = vector.extract_strided_slice %0 {offsets = [0, 1], sizes = [8, 1], strides = [1, 1]} : vector<8x8xi32> to vector<8x1xi32>
    %10 = vector.broadcast %9 : vector<8x1xi32> to vector<8x128xi32>
    %11 = arith.cmpi eq, %1, %10 : vector<8x128xi32>
    %12 = arith.extui %11 : vector<8x128xi1> to vector<8x128xi32>
    %13 = arith.sitofp %12 : vector<8x128xi32> to vector<8x128xf32>
    %14 = arith.addf %8, %13 : vector<8x128xf32>
    %15 = vector.extract_strided_slice %0 {offsets = [0, 2], sizes = [8, 1], strides = [1, 1]} : vector<8x8xi32> to vector<8x1xi32>
    %16 = vector.broadcast %15 : vector<8x1xi32> to vector<8x128xi32>
    %17 = arith.cmpi eq, %1, %16 : vector<8x128xi32>
    %18 = arith.extui %17 : vector<8x128xi1> to vector<8x128xi32>
    %19 = arith.sitofp %18 : vector<8x128xi32> to vector<8x128xf32>
    %20 = arith.addf %14, %19 : vector<8x128xf32>
    %21 = vector.extract_strided_slice %0 {offsets = [0, 3], sizes = [8, 1], strides = [1, 1]} : vector<8x8xi32> to vector<8x1xi32>
    %22 = vector.broadcast %21 : vector<8x1xi32> to vector<8x128xi32>
    %23 = arith.cmpi eq, %1, %22 : vector<8x128xi32>
    %24 = arith.extui %23 : vector<8x128xi1> to vector<8x128xi32>
    %25 = arith.sitofp %24 : vector<8x128xi32> to vector<8x128xf32>
    %26 = arith.addf %20, %25 : vector<8x128xf32>
    %27 = vector.extract_strided_slice %0 {offsets = [0, 4], sizes = [8, 1], strides = [1, 1]} : vector<8x8xi32> to vector<8x1xi32>
    %28 = vector.broadcast %27 : vector<8x1xi32> to vector<8x128xi32>
    %29 = arith.cmpi eq, %1, %28 : vector<8x128xi32>
    %30 = arith.extui %29 : vector<8x128xi1> to vector<8x128xi32>
    %31 = arith.sitofp %30 : vector<8x128xi32> to vector<8x128xf32>
    %32 = arith.addf %26, %31 : vector<8x128xf32>
    %33 = vector.extract_strided_slice %0 {offsets = [0, 5], sizes = [8, 1], strides = [1, 1]} : vector<8x8xi32> to vector<8x1xi32>
    %34 = vector.broadcast %33 : vector<8x1xi32> to vector<8x128xi32>
    %35 = arith.cmpi eq, %1, %34 : vector<8x128xi32>
    %36 = arith.extui %35 : vector<8x128xi1> to vector<8x128xi32>
    %37 = arith.sitofp %36 : vector<8x128xi32> to vector<8x128xf32>
    %38 = arith.addf %32, %37 : vector<8x128xf32>
    %39 = vector.extract_strided_slice %0 {offsets = [0, 6], sizes = [8, 1], strides = [1, 1]} : vector<8x8xi32> to vector<8x1xi32>
    %40 = vector.broadcast %39 : vector<8x1xi32> to vector<8x128xi32>
    %41 = arith.cmpi eq, %1, %40 : vector<8x128xi32>
    %42 = arith.extui %41 : vector<8x128xi1> to vector<8x128xi32>
    %43 = arith.sitofp %42 : vector<8x128xi32> to vector<8x128xf32>
    %44 = arith.addf %38, %43 : vector<8x128xf32>
    %45 = vector.extract_strided_slice %0 {offsets = [0, 7], sizes = [8, 1], strides = [1, 1]} : vector<8x8xi32> to vector<8x1xi32>
    %46 = vector.broadcast %45 : vector<8x1xi32> to vector<8x128xi32>
    %47 = arith.cmpi eq, %1, %46 : vector<8x128xi32>
    %48 = arith.extui %47 : vector<8x128xi1> to vector<8x128xi32>
    %49 = arith.sitofp %48 : vector<8x128xi32> to vector<8x128xf32>
    %50 = arith.addf %44, %49 : vector<8x128xf32>
    %c0_1 = arith.constant 0 : index
    %c0_2 = arith.constant 0 : index
    %51 = vector.load %arg2[%c0_1, %c0_2] : memref<8x8xi32, #tpu.memory_space<vmem>>, vector<8x8xi32>
    %52 = tpu.iota {dimensions = array<i32: 1>} : vector<8x128xi32>
    %cst_3 = arith.constant 0.000000e+00 : f32
    %53 = vector.broadcast %cst_3 : f32 to vector<8x128xf32>
    %54 = vector.extract_strided_slice %51 {offsets = [0, 0], sizes = [8, 1], strides = [1, 1]} : vector<8x8xi32> to vector<8x1xi32>
    %55 = vector.broadcast %54 : vector<8x1xi32> to vector<8x128xi32>
    %56 = arith.cmpi eq, %52, %55 : vector<8x128xi32>
    %57 = arith.extui %56 : vector<8x128xi1> to vector<8x128xi32>
    %58 = arith.sitofp %57 : vector<8x128xi32> to vector<8x128xf32>
    %59 = arith.addf %53, %58 : vector<8x128xf32>
    %60 = vector.extract_strided_slice %51 {offsets = [0, 1], sizes = [8, 1], strides = [1, 1]} : vector<8x8xi32> to vector<8x1xi32>
    %61 = vector.broadcast %60 : vector<8x1xi32> to vector<8x128xi32>
    %62 = arith.cmpi eq, %52, %61 : vector<8x128xi32>
    %63 = arith.extui %62 : vector<8x128xi1> to vector<8x128xi32>
    %64 = arith.sitofp %63 : vector<8x128xi32> to vector<8x128xf32>
    %65 = arith.addf %59, %64 : vector<8x128xf32>
    %66 = vector.extract_strided_slice %51 {offsets = [0, 2], sizes = [8, 1], strides = [1, 1]} : vector<8x8xi32> to vector<8x1xi32>
    %67 = vector.broadcast %66 : vector<8x1xi32> to vector<8x128xi32>
    %68 = arith.cmpi eq, %52, %67 : vector<8x128xi32>
    %69 = arith.extui %68 : vector<8x128xi1> to vector<8x128xi32>
    %70 = arith.sitofp %69 : vector<8x128xi32> to vector<8x128xf32>
    %71 = arith.addf %65, %70 : vector<8x128xf32>
    %72 = vector.extract_strided_slice %51 {offsets = [0, 3], sizes = [8, 1], strides = [1, 1]} : vector<8x8xi32> to vector<8x1xi32>
    %73 = vector.broadcast %72 : vector<8x1xi32> to vector<8x128xi32>
    %74 = arith.cmpi eq, %52, %73 : vector<8x128xi32>
    %75 = arith.extui %74 : vector<8x128xi1> to vector<8x128xi32>
    %76 = arith.sitofp %75 : vector<8x128xi32> to vector<8x128xf32>
    %77 = arith.addf %71, %76 : vector<8x128xf32>
    %78 = vector.extract_strided_slice %51 {offsets = [0, 4], sizes = [8, 1], strides = [1, 1]} : vector<8x8xi32> to vector<8x1xi32>
    %79 = vector.broadcast %78 : vector<8x1xi32> to vector<8x128xi32>
    %80 = arith.cmpi eq, %52, %79 : vector<8x128xi32>
    %81 = arith.extui %80 : vector<8x128xi1> to vector<8x128xi32>
    %82 = arith.sitofp %81 : vector<8x128xi32> to vector<8x128xf32>
    %83 = arith.addf %77, %82 : vector<8x128xf32>
    %84 = vector.extract_strided_slice %51 {offsets = [0, 5], sizes = [8, 1], strides = [1, 1]} : vector<8x8xi32> to vector<8x1xi32>
    %85 = vector.broadcast %84 : vector<8x1xi32> to vector<8x128xi32>
    %86 = arith.cmpi eq, %52, %85 : vector<8x128xi32>
    %87 = arith.extui %86 : vector<8x128xi1> to vector<8x128xi32>
    %88 = arith.sitofp %87 : vector<8x128xi32> to vector<8x128xf32>
    %89 = arith.addf %83, %88 : vector<8x128xf32>
    %90 = vector.extract_strided_slice %51 {offsets = [0, 6], sizes = [8, 1], strides = [1, 1]} : vector<8x8xi32> to vector<8x1xi32>
    %91 = vector.broadcast %90 : vector<8x1xi32> to vector<8x128xi32>
    %92 = arith.cmpi eq, %52, %91 : vector<8x128xi32>
    %93 = arith.extui %92 : vector<8x128xi1> to vector<8x128xi32>
    %94 = arith.sitofp %93 : vector<8x128xi32> to vector<8x128xf32>
    %95 = arith.addf %89, %94 : vector<8x128xf32>
    %96 = vector.extract_strided_slice %51 {offsets = [0, 7], sizes = [8, 1], strides = [1, 1]} : vector<8x8xi32> to vector<8x1xi32>
    %97 = vector.broadcast %96 : vector<8x1xi32> to vector<8x128xi32>
    %98 = arith.cmpi eq, %52, %97 : vector<8x128xi32>
    %99 = arith.extui %98 : vector<8x128xi1> to vector<8x128xi32>
    %100 = arith.sitofp %99 : vector<8x128xi32> to vector<8x128xf32>
    %101 = arith.addf %95, %100 : vector<8x128xf32>
    %102 = tpu.concatenate %50, %101 in 0 : vector<8x128xf32>, vector<8x128xf32> -> vector<16x128xf32>
    %103 = arith.truncf %102 : vector<16x128xf32> to vector<16x128xbf16>
    %c0_4 = arith.constant 0 : index
    %c0_5 = arith.constant 0 : index
    %104 = vector.load %arg3[%c0_4, %c0_5] : memref<128x128xbf16, #tpu.memory_space<vmem>>, vector<128x128xbf16>
    %cst_6 = arith.constant dense<0.000000e+00> : vector<16x128xf32>
    %105 = tpu.matmul %103, %104, %cst_6 {dimension_numbers = #tpu.dot_dimension_numbers<[1], [0], [0], [1], [0, 0, 1, 1], [], []>} : vector<16x128xbf16>, vector<128x128xbf16>, vector<16x128xf32> -> vector<16x128xf32>
    %106 = math.tanh %105 : vector<16x128xf32>
    %107 = arith.truncf %106 : vector<16x128xf32> to vector<16x128xbf16>
    %c0_7 = arith.constant 0 : index
    %c0_8 = arith.constant 0 : index
    %108 = vector.load %arg4[%c0_7, %c0_8] : memref<128x384xbf16, #tpu.memory_space<vmem>>, vector<128x384xbf16>
    %cst_9 = arith.constant dense<0.000000e+00> : vector<16x384xf32>
    %109 = tpu.matmul %107, %108, %cst_9 {dimension_numbers = #tpu.dot_dimension_numbers<[1], [0], [0], [1], [0, 0, 1, 1], [], []>} : vector<16x128xbf16>, vector<128x384xbf16>, vector<16x384xf32> -> vector<16x384xf32>
    %c0_10 = arith.constant 0 : index
    %c0_11 = arith.constant 0 : index
    %110 = vector.load %arg5[%c0_10, %c0_11] : memref<1x384xf32, #tpu.memory_space<vmem>>, vector<1x384xf32>
    %111 = vector.broadcast %110 : vector<1x384xf32> to vector<16x384xf32>
    %112 = arith.addf %109, %111 : vector<16x384xf32>
    %113 = math.tanh %112 : vector<16x384xf32>
    %114 = arith.truncf %113 : vector<16x384xf32> to vector<16x384xbf16>
    %c0_12 = arith.constant 0 : index
    %c0_13 = arith.constant 0 : index
    %115 = vector.load %arg6[%c0_12, %c0_13] : memref<384x512xbf16, #tpu.memory_space<vmem>>, vector<384x512xbf16>
    %cst_14 = arith.constant dense<0.000000e+00> : vector<16x512xf32>
    %116 = tpu.matmul %114, %115, %cst_14 {dimension_numbers = #tpu.dot_dimension_numbers<[1], [0], [0], [1], [0, 0, 1, 1], [], []>} : vector<16x384xbf16>, vector<384x512xbf16>, vector<16x512xf32> -> vector<16x512xf32>
    %c0_15 = arith.constant 0 : index
    %c0_16 = arith.constant 0 : index
    %117 = vector.load %arg7[%c0_15, %c0_16] : memref<1x512xf32, #tpu.memory_space<vmem>>, vector<1x512xf32>
    %118 = vector.broadcast %117 : vector<1x512xf32> to vector<16x512xf32>
    %119 = arith.addf %116, %118 : vector<16x512xf32>
    %120 = math.tanh %119 : vector<16x512xf32>
    %121 = arith.truncf %120 : vector<16x512xf32> to vector<16x512xbf16>
    %c0_17 = arith.constant 0 : index
    %c0_18 = arith.constant 0 : index
    %122 = vector.load %arg8[%c0_17, %c0_18] : memref<512x256xbf16, #tpu.memory_space<vmem>>, vector<512x256xbf16>
    %cst_19 = arith.constant dense<0.000000e+00> : vector<16x256xf32>
    %123 = tpu.matmul %121, %122, %cst_19 {dimension_numbers = #tpu.dot_dimension_numbers<[1], [0], [0], [1], [0, 0, 1, 1], [], []>} : vector<16x512xbf16>, vector<512x256xbf16>, vector<16x256xf32> -> vector<16x256xf32>
    %c0_20 = arith.constant 0 : index
    %c0_21 = arith.constant 0 : index
    %124 = vector.load %arg9[%c0_20, %c0_21] : memref<1x256xf32, #tpu.memory_space<vmem>>, vector<1x256xf32>
    %125 = vector.broadcast %124 : vector<1x256xf32> to vector<16x256xf32>
    %126 = arith.addf %123, %125 : vector<16x256xf32>
    %127 = math.tanh %126 : vector<16x256xf32>
    %128 = vector.extract_strided_slice %127 {offsets = [0, 0], sizes = [8, 256], strides = [1, 1]} : vector<16x256xf32> to vector<8x256xf32>
    %129 = vector.extract_strided_slice %127 {offsets = [8, 0], sizes = [8, 256], strides = [1, 1]} : vector<16x256xf32> to vector<8x256xf32>
    %c0_22 = arith.constant 0 : index
    %c0_23 = arith.constant 0 : index
    %130 = vector.load %arg10[%c0_22, %c0_23] : memref<1x256xf32, #tpu.memory_space<vmem>>, vector<1x256xf32>
    %131 = vector.broadcast %130 : vector<1x256xf32> to vector<8x256xf32>
    %132 = arith.mulf %128, %131 : vector<8x256xf32>
    %c0_24 = arith.constant 0 : index
    %c0_25 = arith.constant 0 : index
    %133 = vector.load %arg11[%c0_24, %c0_25] : memref<1x256xf32, #tpu.memory_space<vmem>>, vector<1x256xf32>
    %134 = vector.broadcast %133 : vector<1x256xf32> to vector<8x256xf32>
    %135 = arith.addf %132, %134 : vector<8x256xf32>
    %c0_26 = arith.constant 0 : index
    %c0_27 = arith.constant 0 : index
    %136 = vector.load %arg12[%c0_26, %c0_27] : memref<1x256xf32, #tpu.memory_space<vmem>>, vector<1x256xf32>
    %137 = vector.broadcast %136 : vector<1x256xf32> to vector<8x256xf32>
    %138 = arith.mulf %129, %137 : vector<8x256xf32>
    %c0_28 = arith.constant 0 : index
    %c0_29 = arith.constant 0 : index
    %139 = vector.load %arg13[%c0_28, %c0_29] : memref<1x256xf32, #tpu.memory_space<vmem>>, vector<1x256xf32>
    %140 = vector.broadcast %139 : vector<1x256xf32> to vector<8x256xf32>
    %141 = arith.addf %138, %140 : vector<8x256xf32>
    %142 = arith.truncf %135 : vector<8x256xf32> to vector<8x256xbf16>
    %c0_30 = arith.constant 0 : index
    %c0_31 = arith.constant 0 : index
    %143 = vector.load %arg14[%c0_30, %c0_31] : memref<256x256xbf16, #tpu.memory_space<vmem>>, vector<256x256xbf16>
    %cst_32 = arith.constant dense<0.000000e+00> : vector<8x256xf32>
    %144 = tpu.matmul %142, %143, %cst_32 {dimension_numbers = #tpu.dot_dimension_numbers<[1], [0], [0], [1], [0, 0, 1, 1], [], []>} : vector<8x256xbf16>, vector<256x256xbf16>, vector<8x256xf32> -> vector<8x256xf32>
    %145 = arith.truncf %141 : vector<8x256xf32> to vector<8x256xbf16>
    %c0_33 = arith.constant 0 : index
    %c0_34 = arith.constant 0 : index
    %146 = vector.load %arg15[%c0_33, %c0_34] : memref<256x256xbf16, #tpu.memory_space<vmem>>, vector<256x256xbf16>
    %cst_35 = arith.constant dense<0.000000e+00> : vector<8x256xf32>
    %147 = tpu.matmul %145, %146, %cst_35 {dimension_numbers = #tpu.dot_dimension_numbers<[1], [0], [0], [1], [0, 0, 1, 1], [], []>} : vector<8x256xbf16>, vector<256x256xbf16>, vector<8x256xf32> -> vector<8x256xf32>
    %148 = arith.addf %144, %147 : vector<8x256xf32>
    %c0_36 = arith.constant 0 : index
    %c0_37 = arith.constant 0 : index
    %149 = vector.load %arg16[%c0_36, %c0_37] : memref<1x256xf32, #tpu.memory_space<vmem>>, vector<1x256xf32>
    %150 = vector.broadcast %149 : vector<1x256xf32> to vector<8x256xf32>
    %151 = arith.addf %148, %150 : vector<8x256xf32>
    %152 = math.tanh %151 : vector<8x256xf32>
    %153 = arith.truncf %152 : vector<8x256xf32> to vector<8x256xbf16>
    %c0_38 = arith.constant 0 : index
    %c0_39 = arith.constant 0 : index
    %154 = vector.load %arg17[%c0_38, %c0_39] : memref<256x2xbf16, #tpu.memory_space<vmem>>, vector<256x2xbf16>
    %cst_40 = arith.constant dense<0.000000e+00> : vector<8x2xf32>
    %155 = tpu.matmul %153, %154, %cst_40 {dimension_numbers = #tpu.dot_dimension_numbers<[1], [0], [0], [1], [0, 0, 1, 1], [], []>} : vector<8x256xbf16>, vector<256x2xbf16>, vector<8x2xf32> -> vector<8x2xf32>
    %c0_41 = arith.constant 0 : index
    %c0_42 = arith.constant 0 : index
    %156 = vector.load %arg18[%c0_41, %c0_42] : memref<1x2xf32, #tpu.memory_space<vmem>>, vector<1x2xf32>
    %157 = vector.broadcast %156 : vector<1x2xf32> to vector<8x2xf32>
    %158 = arith.addf %155, %157 : vector<8x2xf32>
    %c0_43 = arith.constant 0 : index
    %c0_44 = arith.constant 0 : index
    %159 = vector.load %arg19[%c0_43, %c0_44] : memref<8x2xf32, #tpu.memory_space<vmem>>, vector<8x2xf32>
    tpu.vector_store %arg19[%c0_43, %c0_44], %158 {strides = array<i32>} : memref<8x2xf32, #tpu.memory_space<vmem>>, vector<8x2xf32>,
    %cst_45 = arith.constant dense<0xFF800000> : vector<8xf32>
    %160 = vector.multi_reduction <maximumf>, %158, %cst_45 [1] : vector<8x2xf32> to vector<8xf32>
    %161 = vector.shape_cast %160 : vector<8xf32> to vector<8x1xf32>
    %162 = vector.broadcast %161 : vector<8x1xf32> to vector<8x2xf32>
    %163 = arith.subf %158, %162 : vector<8x2xf32>
    %164 = math.exp %163 : vector<8x2xf32>
    %cst_46 = arith.constant dense<0.000000e+00> : vector<8xf32>
    %165 = vector.multi_reduction <add>, %164, %cst_46 [1] : vector<8x2xf32> to vector<8xf32>
    %166 = vector.shape_cast %165 : vector<8xf32> to vector<8x1xf32>
    %167 = tpu.reciprocal %166 {approx = true} : vector<8x1xf32> -> vector<8x1xf32>
    %168 = vector.broadcast %167 : vector<8x1xf32> to vector<8x2xf32>
    %169 = arith.mulf %164, %168 : vector<8x2xf32>
    %c0_47 = arith.constant 0 : index
    %c0_48 = arith.constant 0 : index
    %170 = vector.load %arg20[%c0_47, %c0_48] : memref<8x2xf32, #tpu.memory_space<vmem>>, vector<8x2xf32>
    tpu.vector_store %arg20[%c0_47, %c0_48], %169 {strides = array<i32>} : memref<8x2xf32, #tpu.memory_space<vmem>>, vector<8x2xf32>,
    return
  }
  func.func @transform_0(%arg0: i32) -> (i32, i32) {
    %c0_i32 = arith.constant 0 : i32
    %c0_i32_0 = arith.constant 0 : i32
    return %arg0, %c0_i32 : i32, i32
  }
  func.func @transform_1(%arg0: i32) -> (i32, i32) {
    %c0_i32 = arith.constant 0 : i32
    %c0_i32_0 = arith.constant 0 : i32
    return %arg0, %c0_i32 : i32, i32
  }
  func.func @transform_2(%arg0: i32) -> (i32, i32) {
    %c0_i32 = arith.constant 0 : i32
    %c0_i32_0 = arith.constant 0 : i32
    %c0_i32_1 = arith.constant 0 : i32
    return %c0_i32, %c0_i32_0 : i32, i32
  }
  func.func @transform_3(%arg0: i32) -> (i32, i32) {
    %c0_i32 = arith.constant 0 : i32
    %c0_i32_0 = arith.constant 0 : i32
    %c0_i32_1 = arith.constant 0 : i32
    return %c0_i32, %c0_i32_0 : i32, i32
  }
  func.func @transform_4(%arg0: i32) -> (i32, i32) {
    %c0_i32 = arith.constant 0 : i32
    %c0_i32_0 = arith.constant 0 : i32
    %c0_i32_1 = arith.constant 0 : i32
    return %c0_i32, %c0_i32_0 : i32, i32
  }
  func.func @transform_5(%arg0: i32) -> (i32, i32) {
    %c0_i32 = arith.constant 0 : i32
    %c0_i32_0 = arith.constant 0 : i32
    %c0_i32_1 = arith.constant 0 : i32
    return %c0_i32, %c0_i32_0 : i32, i32
  }
  func.func @transform_6(%arg0: i32) -> (i32, i32) {
    %c0_i32 = arith.constant 0 : i32
    %c0_i32_0 = arith.constant 0 : i32
    %c0_i32_1 = arith.constant 0 : i32
    return %c0_i32, %c0_i32_0 : i32, i32
  }
  func.func @transform_7(%arg0: i32) -> (i32, i32) {
    %c0_i32 = arith.constant 0 : i32
    %c0_i32_0 = arith.constant 0 : i32
    %c0_i32_1 = arith.constant 0 : i32
    return %c0_i32, %c0_i32_0 : i32, i32
  }
  func.func @transform_8(%arg0: i32) -> (i32, i32) {
    %c0_i32 = arith.constant 0 : i32
    %c0_i32_0 = arith.constant 0 : i32
    %c0_i32_1 = arith.constant 0 : i32
    return %c0_i32, %c0_i32_0 : i32, i32
  }
  func.func @transform_9(%arg0: i32) -> (i32, i32) {
    %c0_i32 = arith.constant 0 : i32
    %c0_i32_0 = arith.constant 0 : i32
    %c0_i32_1 = arith.constant 0 : i32
    return %c0_i32, %c0_i32_0 : i32, i32
  }
  func.func @transform_10(%arg0: i32) -> (i32, i32) {
    %c0_i32 = arith.constant 0 : i32
    %c0_i32_0 = arith.constant 0 : i32
    %c0_i32_1 = arith.constant 0 : i32
    return %c0_i32, %c0_i32_0 : i32, i32
  }
  func.func @transform_11(%arg0: i32) -> (i32, i32) {
    %c0_i32 = arith.constant 0 : i32
    %c0_i32_0 = arith.constant 0 : i32
    %c0_i32_1 = arith.constant 0 : i32
    return %c0_i32, %c0_i32_0 : i32, i32
  }
  func.func @transform_12(%arg0: i32) -> (i32, i32) {
    %c0_i32 = arith.constant 0 : i32
    %c0_i32_0 = arith.constant 0 : i32
    %c0_i32_1 = arith.constant 0 : i32
    return %c0_i32, %c0_i32_0 : i32, i32
  }
  func.func @transform_13(%arg0: i32) -> (i32, i32) {
    %c0_i32 = arith.constant 0 : i32
    %c0_i32_0 = arith.constant 0 : i32
    %c0_i32_1 = arith.constant 0 : i32
    return %c0_i32, %c0_i32_0 : i32, i32
  }
  func.func @transform_14(%arg0: i32) -> (i32, i32) {
    %c0_i32 = arith.constant 0 : i32
    %c0_i32_0 = arith.constant 0 : i32
    %c0_i32_1 = arith.constant 0 : i32
    return %c0_i32, %c0_i32_0 : i32, i32
  }
  func.func @transform_15(%arg0: i32) -> (i32, i32) {
    %c0_i32 = arith.constant 0 : i32
    %c0_i32_0 = arith.constant 0 : i32
    %c0_i32_1 = arith.constant 0 : i32
    return %c0_i32, %c0_i32_0 : i32, i32
  }
  func.func @transform_16(%arg0: i32) -> (i32, i32) {
    %c0_i32 = arith.constant 0 : i32
    %c0_i32_0 = arith.constant 0 : i32
    %c0_i32_1 = arith.constant 0 : i32
    return %c0_i32, %c0_i32_0 : i32, i32
  }
  func.func @transform_17(%arg0: i32) -> (i32, i32) {
    %c0_i32 = arith.constant 0 : i32
    %c0_i32_0 = arith.constant 0 : i32
    %c0_i32_1 = arith.constant 0 : i32
    return %c0_i32, %c0_i32_0 : i32, i32
  }
  func.func @transform_18(%arg0: i32) -> (i32, i32) {
    %c0_i32 = arith.constant 0 : i32
    %c0_i32_0 = arith.constant 0 : i32
    return %arg0, %c0_i32 : i32, i32
  }
  func.func @transform_19(%arg0: i32) -> (i32, i32) {
    %c0_i32 = arith.constant 0 : i32
    %c0_i32_0 = arith.constant 0 : i32
    return %arg0, %c0_i32 : i32, i32
  }
}

</mosaic_0001>

<llo_original>
// kernel: tpu_custom_call.1
$region0: #{tpu_custom_call.1}
  #allocation0 [shape = 'u32[]', space=smem, size = 0x4, offset = 0x4, fixed_abs, tag = 'smem constant byte address 0x4 - core index']
  #allocation1 [shape = 'u32[144,128]{1,0:T(1,128)}', space=vmem, size = 0x12000, scoped, tag = 'internal scratch']
  %s0 = inlined_call_operand.vmem [shape: s32[8,8], index: 0, kind: input, shape index: {}]
  %s1 = inlined_call_operand.vmem [shape: s32[8,8], index: 1, kind: input, shape index: {}]
  %s2 = inlined_call_operand.vmem [shape: bf16[128,128], index: 2, kind: input, shape index: {}]
  %s3 = inlined_call_operand.hbm [shape: bf16[128,384], index: 3, kind: input, shape index: {}]
  %s4 = inlined_call_operand.vmem [shape: f32[1,384], index: 4, kind: input, shape index: {}]
  %s5 = inlined_call_operand.hbm [shape: bf16[384,512], index: 5, kind: input, shape index: {}]
  %s6 = inlined_call_operand.vmem [shape: f32[1,512], index: 6, kind: input, shape index: {}]
  %s7 = inlined_call_operand.hbm [shape: bf16[512,256], index: 7, kind: input, shape index: {}]
  %s8 = inlined_call_operand.vmem [shape: f32[1,256], index: 8, kind: input, shape index: {}]
  %s9 = inlined_call_operand.vmem [shape: f32[1,256], index: 9, kind: input, shape index: {}]
  %s10 = inlined_call_operand.vmem [shape: f32[1,256], index: 10, kind: input, shape index: {}]
  %s11 = inlined_call_operand.vmem [shape: f32[1,256], index: 11, kind: input, shape index: {}]
  %s12 = inlined_call_operand.vmem [shape: f32[1,256], index: 12, kind: input, shape index: {}]
  %s13 = inlined_call_operand.hbm [shape: bf16[256,256], index: 13, kind: input, shape index: {}]
  %s14 = inlined_call_operand.hbm [shape: bf16[256,256], index: 14, kind: input, shape index: {}]
  %s15 = inlined_call_operand.vmem [shape: f32[1,256], index: 15, kind: input, shape index: {}]
  %s16 = inlined_call_operand.vmem [shape: bf16[256,2], index: 16, kind: input, shape index: {}]
  %s17 = inlined_call_operand.vmem [shape: f32[1,2], index: 17, kind: input, shape index: {}]
  %s18 = inlined_call_operand.vmem [shape: f32[8,2], index: 18, kind: output, shape index: {0}]
  %s19 = inlined_call_operand.vmem [shape: f32[8,2], index: 19, kind: output, shape index: {1}]
  %20 = xla_tuple %s18, %s19
  %s21 = sld [smem:[#allocation0]]
  $region110: #{tpu_custom_call.1} parent=0
    _
  %s23 = ssub.s32 1, %s21
  %s24 = scalar_select 0, %s23, %s21
  $region1: #{tpu_custom_call.1} parent=0
    #allocation2 [shape = 'u8[98304]{0}', space=vmem, size = 0x18000, scoped, tag = 'input window, operand 3, single buffered']
    #allocation3 [shape = 's32[1]{0}', space=sflag, size = 0x4, scoped, tag = 'scoped memory for tpu_custom_call.1']
    #allocation4 [shape = 'u8[393216]{0}', space=vmem, size = 0x60000, scoped, tag = 'input window, operand 5, single buffered']
    #allocation5 [shape = 's32[1]{0}', space=sflag, size = 0x4, scoped, tag = 'scoped memory for tpu_custom_call.1']
    #allocation6 [shape = 'u8[262144]{0}', space=vmem, size = 0x40000, scoped, tag = 'input window, operand 7, single buffered']
    #allocation7 [shape = 'u8[131072]{0}', space=vmem, size = 0x20000, scoped, tag = 'input window, operand 13, single buffered']
    #allocation8 [shape = 's32[1]{0}', space=sflag, size = 0x4, scoped, tag = 'scoped memory for tpu_custom_call.1']
    #allocation9 [shape = 'u8[131072]{0}', space=vmem, size = 0x20000, scoped, tag = 'input window, operand 14, single buffered']
    %25 = vsyncpa [#allocation3], 0
    %26 = vsyncpa [#allocation5], 0
    %27 = vsyncpa [#allocation8], 0
    // Predicated region
    $region2: #{tpu_custom_call.1} parent=1 // pred_check
      _
    $region3: #{tpu_custom_call.1} parent=1 // pred_check_branch
      %29 = sbr.rel (0) target = $region5
    $region4: #{tpu_custom_call.1} parent=1 // pred_region
      _
    $region5: #{tpu_custom_call.1} parent=1 // pred_fallthru
      _
    // Predicated region
    $region6: #{tpu_custom_call.1} parent=1 // pred_check
      _
    $region7: #{tpu_custom_call.1} parent=1 // pred_check_branch
      %31 = sbr.rel (0) target = $region9
    $region8: #{tpu_custom_call.1} parent=1 // pred_region
      _
    $region9: #{tpu_custom_call.1} parent=1 // pred_fallthru
      _
    // Predicated region
    $region10: #{tpu_custom_call.1} parent=1 // pred_check
      _
    $region11: #{tpu_custom_call.1} parent=1 // pred_check_branch
      %33 = sbr.rel (0) target = $region13
    $region12: #{tpu_custom_call.1} parent=1 // pred_region
      _
    $region13: #{tpu_custom_call.1} parent=1 // pred_fallthru
      _
    // Predicated region
    $region14: #{tpu_custom_call.1} parent=1 // pred_check
      _
    $region15: #{tpu_custom_call.1} parent=1 // pred_check_branch
      %35 = sbr.rel (0) target = $region17
    $region16: #{tpu_custom_call.1} parent=1 // pred_region
      %s37 = ssub.s32 3072, 3072
      %38 = vsyncadd [#allocation3], %s37
      %s39 = sshll.u32 [#allocation2], 4
      %s40 = int_to_ptr.vmem [resolvable:$true] %s39
      %45 = dma.hbm_to_vmem [thread:$0]  %s3, 3072, %s40, [#allocation3], 192, 192, 12
    $region17: #{tpu_custom_call.1} parent=1 // pred_fallthru
      _
    // Predicated region
    $region18: #{tpu_custom_call.1} parent=1 // pred_check
      _
    $region19: #{tpu_custom_call.1} parent=1 // pred_check_branch
      %47 = sbr.rel (0) target = $region21
    $region20: #{tpu_custom_call.1} parent=1 // pred_region
      _
    $region21: #{tpu_custom_call.1} parent=1 // pred_fallthru
      _
    // Predicated region
    $region22: #{tpu_custom_call.1} parent=1 // pred_check
      _
    $region23: #{tpu_custom_call.1} parent=1 // pred_check_branch
      %49 = sbr.rel (0) target = $region25
    $region24: #{tpu_custom_call.1} parent=1 // pred_region
      %s51 = ssub.s32 12288, 12288
      %52 = vsyncadd [#allocation5], %s51
      %s53 = sshll.u32 [#allocation4], 4
      %s54 = int_to_ptr.vmem [resolvable:$true] %s53
      %59 = dma.hbm_to_vmem [thread:$0]  %s5, 12288, %s54, [#allocation5], 256, 256, 16
    $region25: #{tpu_custom_call.1} parent=1 // pred_fallthru
      _
    // Predicated region
    $region26: #{tpu_custom_call.1} parent=1 // pred_check
      _
    $region27: #{tpu_custom_call.1} parent=1 // pred_check_branch
      %61 = sbr.rel (0) target = $region29
    $region28: #{tpu_custom_call.1} parent=1 // pred_region
      _
    $region29: #{tpu_custom_call.1} parent=1 // pred_fallthru
      _
    // Predicated region
    $region30: #{tpu_custom_call.1} parent=1 // pred_check
      _
    $region31: #{tpu_custom_call.1} parent=1 // pred_check_branch
      %63 = sbr.rel (0) target = $region33
    $region32: #{tpu_custom_call.1} parent=1 // pred_region
      %s65 = ssub.s32 8192, 8192
      %66 = vsyncadd [#allocation5], %s65
      %s67 = sshll.u32 [#allocation6], 4
      %s68 = int_to_ptr.vmem [resolvable:$true] %s67
      %73 = dma.hbm_to_vmem [thread:$0]  %s7, 8192, %s68, [#allocation5], 128, 128, 8
    $region33: #{tpu_custom_call.1} parent=1 // pred_fallthru
      _
    // Predicated region
    $region34: #{tpu_custom_call.1} parent=1 // pred_check
      _
    $region35: #{tpu_custom_call.1} parent=1 // pred_check_branch
      %75 = sbr.rel (0) target = $region37
    $region36: #{tpu_custom_call.1} parent=1 // pred_region
      _
    $region37: #{tpu_custom_call.1} parent=1 // pred_fallthru
      _
    // Predicated region
    $region38: #{tpu_custom_call.1} parent=1 // pred_check
      _
    $region39: #{tpu_custom_call.1} parent=1 // pred_check_branch
      %77 = sbr.rel (0) target = $region41
    $region40: #{tpu_custom_call.1} parent=1 // pred_region
      _
    $region41: #{tpu_custom_call.1} parent=1 // pred_fallthru
      _
    // Predicated region
    $region42: #{tpu_custom_call.1} parent=1 // pred_check
      _
    $region43: #{tpu_custom_call.1} parent=1 // pred_check_branch
      %79 = sbr.rel (0) target = $region45
    $region44: #{tpu_custom_call.1} parent=1 // pred_region
      _
    $region45: #{tpu_custom_call.1} parent=1 // pred_fallthru
      _
    // Predicated region
    $region46: #{tpu_custom_call.1} parent=1 // pred_check
      _
    $region47: #{tpu_custom_call.1} parent=1 // pred_check_branch
      %81 = sbr.rel (0) target = $region49
    $region48: #{tpu_custom_call.1} parent=1 // pred_region
      _
    $region49: #{tpu_custom_call.1} parent=1 // pred_fallthru
      _
    // Predicated region
    $region50: #{tpu_custom_call.1} parent=1 // pred_check
      _
    $region51: #{tpu_custom_call.1} parent=1 // pred_check_branch
      %83 = sbr.rel (0) target = $region53
    $region52: #{tpu_custom_call.1} parent=1 // pred_region
      _
    $region53: #{tpu_custom_call.1} parent=1 // pred_fallthru
      _
    // Predicated region
    $region54: #{tpu_custom_call.1} parent=1 // pred_check
      _
    $region55: #{tpu_custom_call.1} parent=1 // pred_check_branch
      %85 = sbr.rel (0) target = $region57
    $region56: #{tpu_custom_call.1} parent=1 // pred_region
      %s87 = ssub.s32 4096, 4096
      %88 = vsyncadd [#allocation8], %s87
      %s89 = sshll.u32 [#allocation7], 4
      %s90 = int_to_ptr.vmem [resolvable:$true] %s89
      %95 = dma.hbm_to_vmem [thread:$0]  %s13, 4096, %s90, [#allocation8], 128, 128, 8
    $region57: #{tpu_custom_call.1} parent=1 // pred_fallthru
      _
    // Predicated region
    $region58: #{tpu_custom_call.1} parent=1 // pred_check
      _
    $region59: #{tpu_custom_call.1} parent=1 // pred_check_branch
      %97 = sbr.rel (0) target = $region61
    $region60: #{tpu_custom_call.1} parent=1 // pred_region
      %s99 = ssub.s32 4096, 4096
      %100 = vsyncadd [#allocation8], %s99
      %s101 = sshll.u32 [#allocation9], 4
      %s102 = int_to_ptr.vmem [resolvable:$true] %s101
      %107 = dma.hbm_to_vmem [thread:$0]  %s14, 4096, %s102, [#allocation8], 128, 128, 8
    $region61: #{tpu_custom_call.1} parent=1 // pred_fallthru
      _
    // Predicated region
    $region62: #{tpu_custom_call.1} parent=1 // pred_check
      _
    $region63: #{tpu_custom_call.1} parent=1 // pred_check_branch
      %109 = sbr.rel (0) target = $region65
    $region64: #{tpu_custom_call.1} parent=1 // pred_region
      _
    $region65: #{tpu_custom_call.1} parent=1 // pred_fallthru
      _
    // Predicated region
    $region66: #{tpu_custom_call.1} parent=1 // pred_check
      _
    $region67: #{tpu_custom_call.1} parent=1 // pred_check_branch
      %111 = sbr.rel (0) target = $region69
    $region68: #{tpu_custom_call.1} parent=1 // pred_region
      _
    $region69: #{tpu_custom_call.1} parent=1 // pred_fallthru
      _
    // Predicated region
    $region70: #{tpu_custom_call.1} parent=1 // pred_check
      _
    $region71: #{tpu_custom_call.1} parent=1 // pred_check_branch
      %113 = sbr.rel (0) target = $region73
    $region72: #{tpu_custom_call.1} parent=1 // pred_region
      _
    $region73: #{tpu_custom_call.1} parent=1 // pred_fallthru
      _
    // Predicated region
    $region74: #{tpu_custom_call.1} parent=1 // pred_check
      _
    $region75: #{tpu_custom_call.1} parent=1 // pred_check_branch
      %115 = sbr.rel (0) target = $region77
    $region76: #{tpu_custom_call.1} parent=1 // pred_region
      %116 = dma.done [#allocation3], 3072
    $region77: #{tpu_custom_call.1} parent=1 // pred_fallthru
      _
    // Predicated region
    $region78: #{tpu_custom_call.1} parent=1 // pred_check
      _
    $region79: #{tpu_custom_call.1} parent=1 // pred_check_branch
      %118 = sbr.rel (0) target = $region81
    $region80: #{tpu_custom_call.1} parent=1 // pred_region
      %119 = dma.done [#allocation5], 12288
    $region81: #{tpu_custom_call.1} parent=1 // pred_fallthru
      _
    // Predicated region
    $region82: #{tpu_custom_call.1} parent=1 // pred_check
      _
    $region83: #{tpu_custom_call.1} parent=1 // pred_check_branch
      %121 = sbr.rel (0) target = $region85
    $region84: #{tpu_custom_call.1} parent=1 // pred_region
      %122 = dma.done [#allocation5], 8192
    $region85: #{tpu_custom_call.1} parent=1 // pred_fallthru
      _
    // Predicated region
    $region86: #{tpu_custom_call.1} parent=1 // pred_check
      _
    $region87: #{tpu_custom_call.1} parent=1 // pred_check_branch
      %124 = sbr.rel (0) target = $region89
    $region88: #{tpu_custom_call.1} parent=1 // pred_region
      %125 = dma.done [#allocation8], 4096
    $region89: #{tpu_custom_call.1} parent=1 // pred_fallthru
      _
    // Predicated region
    $region90: #{tpu_custom_call.1} parent=1 // pred_check
      _
    $region91: #{tpu_custom_call.1} parent=1 // pred_check_branch
      %127 = sbr.rel (0) target = $region93
    $region92: #{tpu_custom_call.1} parent=1 // pred_region
      %128 = dma.done [#allocation8], 4096
    $region93: #{tpu_custom_call.1} parent=1 // pred_fallthru
      _
    %v130 = vld [vmem:[%s0] sm:$0xff]
    %v131 = vlaneseq
    %v132 = vand.u32 %v131, 127
    %133 = vset.pattern.permute.xlu0 0
    %134 = vperm.xlu0 %133, %v130
    %v135 = vpop.permute.xlu0 %134
    %vm136 = vcmp.eq.s32.totalorder %v132, %v135
    %v137 = vsel %vm136, 1, 0
    %v138 = vcvt.s32.f32 %v137
    %v139 = vadd.f32 %v138, 0.0
    %140 = vset.pattern.permute.xlu0 1
    %141 = vperm.xlu0 %140, %v130
    %v142 = vpop.permute.xlu0 %141
    %vm143 = vcmp.eq.s32.totalorder %v132, %v142
    %v144 = vsel %vm143, 1, 0
    %v145 = vcvt.s32.f32 %v144
    %v146 = vadd.f32 %v139, %v145
    %147 = vset.pattern.permute.xlu0 2
    %148 = vperm.xlu0 %147, %v130
    %v149 = vpop.permute.xlu0 %148
    %vm150 = vcmp.eq.s32.totalorder %v132, %v149
    %v151 = vsel %vm150, 1, 0
    %v152 = vcvt.s32.f32 %v151
    %v153 = vadd.f32 %v146, %v152
    %154 = vset.pattern.permute.xlu0 3
    %155 = vperm.xlu0 %154, %v130
    %v156 = vpop.permute.xlu0 %155
    %vm157 = vcmp.eq.s32.totalorder %v132, %v156
    %v158 = vsel %vm157, 1, 0
    %v159 = vcvt.s32.f32 %v158
    %v160 = vadd.f32 %v153, %v159
    %161 = vset.pattern.permute.xlu0 4
    %162 = vperm.xlu0 %161, %v130
    %v163 = vpop.permute.xlu0 %162
    %vm164 = vcmp.eq.s32.totalorder %v132, %v163
    %v165 = vsel %vm164, 1, 0
    %v166 = vcvt.s32.f32 %v165
    %v167 = vadd.f32 %v160, %v166
    %168 = vset.pattern.permute.xlu0 5
    %169 = vperm.xlu0 %168, %v130
    %v170 = vpop.permute.xlu0 %169
    %vm171 = vcmp.eq.s32.totalorder %v132, %v170
    %v172 = vsel %vm171, 1, 0
    %v173 = vcvt.s32.f32 %v172
    %v174 = vadd.f32 %v167, %v173
    %175 = vset.pattern.permute.xlu0 6
    %176 = vperm.xlu0 %175, %v130
    %v177 = vpop.permute.xlu0 %176
    %vm178 = vcmp.eq.s32.totalorder %v132, %v177
    %v179 = vsel %vm178, 1, 0
    %v180 = vcvt.s32.f32 %v179
    %v181 = vadd.f32 %v174, %v180
    %182 = vset.pattern.permute.xlu0 7
    %183 = vperm.xlu0 %182, %v130
    %v184 = vpop.permute.xlu0 %183
    %vm185 = vcmp.eq.s32.totalorder %v132, %v184
    %v186 = vsel %vm185, 1, 0
    %v187 = vcvt.s32.f32 %v186
    %v188 = vadd.f32 %v181, %v187
    %v189 = vld [vmem:[%s1] sm:$0xff]
    %190 = vset.pattern.permute.xlu0 0
    %191 = vperm.xlu0 %190, %v189
    %v192 = vpop.permute.xlu0 %191
    %vm193 = vcmp.eq.s32.totalorder %v132, %v192
    %v194 = vsel %vm193, 1, 0
    %v195 = vcvt.s32.f32 %v194
    %v196 = vadd.f32 %v195, 0.0
    %197 = vset.pattern.permute.xlu0 1
    %198 = vperm.xlu0 %197, %v189
    %v199 = vpop.permute.xlu0 %198
    %vm200 = vcmp.eq.s32.totalorder %v132, %v199
    %v201 = vsel %vm200, 1, 0
    %v202 = vcvt.s32.f32 %v201
    %v203 = vadd.f32 %v196, %v202
    %204 = vset.pattern.permute.xlu0 2
    %205 = vperm.xlu0 %204, %v189
    %v206 = vpop.permute.xlu0 %205
    %vm207 = vcmp.eq.s32.totalorder %v132, %v206
    %v208 = vsel %vm207, 1, 0
    %v209 = vcvt.s32.f32 %v208
    %v210 = vadd.f32 %v203, %v209
    %211 = vset.pattern.permute.xlu0 3
    %212 = vperm.xlu0 %211, %v189
    %v213 = vpop.permute.xlu0 %212
    %vm214 = vcmp.eq.s32.totalorder %v132, %v213
    %v215 = vsel %vm214, 1, 0
    %v216 = vcvt.s32.f32 %v215
    %v217 = vadd.f32 %v210, %v216
    %218 = vset.pattern.permute.xlu0 4
    %219 = vperm.xlu0 %218, %v189
    %v220 = vpop.permute.xlu0 %219
    %vm221 = vcmp.eq.s32.totalorder %v132, %v220
    %v222 = vsel %vm221, 1, 0
    %v223 = vcvt.s32.f32 %v222
    %v224 = vadd.f32 %v217, %v223
    %225 = vset.pattern.permute.xlu0 5
    %226 = vperm.xlu0 %225, %v189
    %v227 = vpop.permute.xlu0 %226
    %vm228 = vcmp.eq.s32.totalorder %v132, %v227
    %v229 = vsel %vm228, 1, 0
    %v230 = vcvt.s32.f32 %v229
    %v231 = vadd.f32 %v224, %v230
    %232 = vset.pattern.permute.xlu0 6
    %233 = vperm.xlu0 %232, %v189
    %v234 = vpop.permute.xlu0 %233
    %vm235 = vcmp.eq.s32.totalorder %v132, %v234
    %v236 = vsel %vm235, 1, 0
    %v237 = vcvt.s32.f32 %v236
    %v238 = vadd.f32 %v231, %v237
    %239 = vset.pattern.permute.xlu0 7
    %240 = vperm.xlu0 %239, %v189
    %v241 = vpop.permute.xlu0 %240
    %vm242 = vcmp.eq.s32.totalorder %v132, %v241
    %v243 = vsel %vm242, 1, 0
    %v244 = vcvt.s32.f32 %v243
    %v245 = vadd.f32 %v238, %v244
    %v246 = vpack.c.bf16 %v245, %v188
    %v247 = vld [vmem:[%s2] sm:$0xf]
    %v248 = vld [vmem:[%s2 + $0x4] sm:$0xf]
    %v249 = vld [vmem:[%s2 + $0x8] sm:$0xf]
    %v250 = vld [vmem:[%s2 + $0xc] sm:$0xf]
    %v251 = vld [vmem:[%s2 + $0x10] sm:$0xf]
    %v252 = vld [vmem:[%s2 + $0x14] sm:$0xf]
    %v253 = vld [vmem:[%s2 + $0x18] sm:$0xf]
    %v254 = vld [vmem:[%s2 + $0x1c] sm:$0xf]
    %v255 = vld [vmem:[%s2 + $0x20] sm:$0xf]
    %v256 = vld [vmem:[%s2 + $0x24] sm:$0xf]
    %v257 = vld [vmem:[%s2 + $0x28] sm:$0xf]
    %v258 = vld [vmem:[%s2 + $0x2c] sm:$0xf]
    %v259 = vld [vmem:[%s2 + $0x30] sm:$0xf]
    %v260 = vld [vmem:[%s2 + $0x34] sm:$0xf]
    %v261 = vld [vmem:[%s2 + $0x38] sm:$0xf]
    %v262 = vld [vmem:[%s2 + $0x3c] sm:$0xf]
    %v279 = vunpack.c.l.b16 %v247
    %v280 = vunpack.c.l.b16 %v248
    %v281 = vunpack.c.l.b16 %v249
    %v282 = vunpack.c.l.b16 %v250
    %v283 = vunpack.c.l.b16 %v251
    %v284 = vunpack.c.l.b16 %v252
    %v285 = vunpack.c.l.b16 %v253
    %v286 = vunpack.c.l.b16 %v254
    %v287 = vunpack.c.l.b16 %v255
    %v288 = vunpack.c.l.b16 %v256
    %v289 = vunpack.c.l.b16 %v257
    %v290 = vunpack.c.l.b16 %v258
    %v291 = vunpack.c.l.b16 %v259
    %v292 = vunpack.c.l.b16 %v260
    %v293 = vunpack.c.l.b16 %v261
    %v294 = vunpack.c.l.b16 %v262
    %v295 = vpack.c.b16 %v280, %v279
    %v296 = vpack.c.b16 %v282, %v281
    %v297 = vpack.c.b16 %v284, %v283
    %v298 = vpack.c.b16 %v286, %v285
    %v299 = vpack.c.b16 %v288, %v287
    %v300 = vpack.c.b16 %v290, %v289
    %v301 = vpack.c.b16 %v292, %v291
    %v302 = vpack.c.b16 %v294, %v293
    %311 = vmatprep.subr.bf16.mxu0 0
    %312 = vmatpush1.bf16.msra.mxu0 %v295
    %313 = vmatprep.subr.bf16.mxu0 0
    %314 = vmatpush1.bf16.msra.mxu0 %v296
    %315 = vmatprep.subr.bf16.mxu0 0
    %316 = vmatpush1.bf16.msra.mxu0 %v297
    %317 = vmatprep.subr.bf16.mxu0 0
    %318 = vmatpush1.bf16.msra.mxu0 %v298
    %319 = vmatprep.subr.bf16.mxu0 0
    %320 = vmatpush1.bf16.msra.mxu0 %v299
    %321 = vmatprep.subr.bf16.mxu0 0
    %322 = vmatpush1.bf16.msra.mxu0 %v300
    %323 = vmatprep.subr.bf16.mxu0 0
    %324 = vmatpush1.bf16.msra.mxu0 %v301
    %325 = vmatprep.subr.bf16.mxu0 0
    %326 = vmatpush1.bf16.msra.mxu0 %v302
    %327 = vmatprep.subr.bf16.mxu0 0
    %328 = vmatpush1.bf16.msra.mxu0 0
    %329 = vmatprep.subr.bf16.mxu0 0
    %330 = vmatpush1.bf16.msra.mxu0 0
    %331 = vmatprep.subr.bf16.mxu0 0
    %332 = vmatpush1.bf16.msra.mxu0 0
    %333 = vmatprep.subr.bf16.mxu0 0
    %334 = vmatpush1.bf16.msra.mxu0 0
    %335 = vmatprep.subr.bf16.mxu0 0
    %336 = vmatpush1.bf16.msra.mxu0 0
    %337 = vmatprep.subr.bf16.mxu0 0
    %338 = vmatpush1.bf16.msra.mxu0 0
    %339 = vmatprep.subr.bf16.mxu0 0
    %340 = vmatpush1.bf16.msra.mxu0 0
    %341 = vmatprep.subr.bf16.mxu0 0
    %342 = vmatpush1.bf16.msra.mxu0 0
    %343 = vmatprep.mubr.bf16.mxu0 0
    %344 = vmatmul.mubr.bf16.gmra.mrb[0].mxu0 %v246
    %v345 = vpop.f32.mrb[0].mxu0
    %v346 = vadd.f32 0.0, %v345
    %v347 = vpop.f32.mrb[0].mxu0
    %v348 = vpop.f32.mrb[0].mxu0
    %v349 = vadd.f32 0.0, %v348
    %v350 = vpop.f32.mrb[0].mxu0
    %351 = vdwg.mxu0
    %v352 = vtanh.pop %v346
    %v353 = vtanh.pop %v349
    %v354 = vpack.c.bf16 %v353, %v352
    %v355 = vld [vmem:[#allocation2] sm:$0xff]
    %v356 = vld [vmem:[#allocation2 + $0x8] sm:$0xf]
    %v357 = vld [vmem:[#allocation2 + $0xc] sm:$0xff]
    %v358 = vld [vmem:[#allocation2 + $0x14] sm:$0xf]
    %v359 = vld [vmem:[#allocation2 + $0x18] sm:$0xff]
    %v360 = vld [vmem:[#allocation2 + $0x20] sm:$0xf]
    %v361 = vld [vmem:[#allocation2 + $0x24] sm:$0xff]
    %v362 = vld [vmem:[#allocation2 + $0x2c] sm:$0xf]
    %v363 = vld [vmem:[#allocation2 + $0x30] sm:$0xff]
    %v364 = vld [vmem:[#allocation2 + $0x38] sm:$0xf]
    %v365 = vld [vmem:[#allocation2 + $0x3c] sm:$0xff]
    %v366 = vld [vmem:[#allocation2 + $0x44] sm:$0xf]
    %v367 = vld [vmem:[#allocation2 + $0x48] sm:$0xff]
    %v368 = vld [vmem:[#allocation2 + $0x50] sm:$0xf]
    %v369 = vld [vmem:[#allocation2 + $0x54] sm:$0xff]
    %v370 = vld [vmem:[#allocation2 + $0x5c] sm:$0xf]
    %v371 = vld [vmem:[#allocation2 + $0x60] sm:$0xff]
    %v372 = vld [vmem:[#allocation2 + $0x68] sm:$0xf]
    %v373 = vld [vmem:[#allocation2 + $0x6c] sm:$0xff]
    %v374 = vld [vmem:[#allocation2 + $0x74] sm:$0xf]
    %v375 = vld [vmem:[#allocation2 + $0x78] sm:$0xff]
    %v376 = vld [vmem:[#allocation2 + $0x80] sm:$0xf]
    %v377 = vld [vmem:[#allocation2 + $0x84] sm:$0xff]
    %v378 = vld [vmem:[#allocation2 + $0x8c] sm:$0xf]
    %v379 = vld [vmem:[#allocation2 + $0x90] sm:$0xff]
    %v380 = vld [vmem:[#allocation2 + $0x98] sm:$0xf]
    %v381 = vld [vmem:[#allocation2 + $0x9c] sm:$0xff]
    %v382 = vld [vmem:[#allocation2 + $0xa4] sm:$0xf]
    %v383 = vld [vmem:[#allocation2 + $0xa8] sm:$0xff]
    %v384 = vld [vmem:[#allocation2 + $0xb0] sm:$0xf]
    %v385 = vld [vmem:[#allocation2 + $0xb4] sm:$0xff]
    %v386 = vld [vmem:[#allocation2 + $0xbc] sm:$0xf]
    %v387 = vld [vmem:[%s4] sm:$0x7]
    %v389 = vlaneseq
    %v390 = vshrl.u32 %v389, 7
    %v391 = vsub.s32 0, %v390
    %v392 = vrot.slane %v387, %v391
    %v393 = vlaneseq
    %v394 = vshrl.u32 %v393, 7
    %v395 = vsub.s32 1, %v394
    %v396 = vrot.slane %v387, %v395
    %v397 = vlaneseq
    %v398 = vshrl.u32 %v397, 7
    %v399 = vsub.s32 2, %v398
    %v400 = vrot.slane %v387, %v399
    %v436 = vunpack.c.l.b16 %v355
    %v437 = vunpack.c.h.b16 %v355
    %v438 = vunpack.c.l.b16 %v356
    %v439 = vunpack.c.l.b16 %v357
    %v440 = vunpack.c.h.b16 %v357
    %v441 = vunpack.c.l.b16 %v358
    %v442 = vunpack.c.l.b16 %v359
    %v443 = vunpack.c.h.b16 %v359
    %v444 = vunpack.c.l.b16 %v360
    %v445 = vunpack.c.l.b16 %v361
    %v446 = vunpack.c.h.b16 %v361
    %v447 = vunpack.c.l.b16 %v362
    %v448 = vunpack.c.l.b16 %v363
    %v449 = vunpack.c.h.b16 %v363
    %v450 = vunpack.c.l.b16 %v364
    %v451 = vunpack.c.l.b16 %v365
    %v452 = vunpack.c.h.b16 %v365
    %v453 = vunpack.c.l.b16 %v366
    %v454 = vunpack.c.l.b16 %v367
    %v455 = vunpack.c.h.b16 %v367
    %v456 = vunpack.c.l.b16 %v368
    %v457 = vunpack.c.l.b16 %v369
    %v458 = vunpack.c.h.b16 %v369
    %v459 = vunpack.c.l.b16 %v370
    %v460 = vunpack.c.l.b16 %v371
    %v461 = vunpack.c.h.b16 %v371
    %v462 = vunpack.c.l.b16 %v372
    %v463 = vunpack.c.l.b16 %v373
    %v464 = vunpack.c.h.b16 %v373
    %v465 = vunpack.c.l.b16 %v374
    %v466 = vunpack.c.l.b16 %v375
    %v467 = vunpack.c.h.b16 %v375
    %v468 = vunpack.c.l.b16 %v376
    %v469 = vunpack.c.l.b16 %v377
    %v470 = vunpack.c.h.b16 %v377
    %v471 = vunpack.c.l.b16 %v378
    %v472 = vunpack.c.l.b16 %v379
    %v473 = vunpack.c.h.b16 %v379
    %v474 = vunpack.c.l.b16 %v380
    %v475 = vunpack.c.l.b16 %v381
    %v476 = vunpack.c.h.b16 %v381
    %v477 = vunpack.c.l.b16 %v382
    %v478 = vunpack.c.l.b16 %v383
    %v479 = vunpack.c.h.b16 %v383
    %v480 = vunpack.c.l.b16 %v384
    %v481 = vunpack.c.l.b16 %v385
    %v482 = vunpack.c.h.b16 %v385
    %v483 = vunpack.c.l.b16 %v386
    %v484 = vpack.c.b16 %v439, %v436
    %v485 = vpack.c.b16 %v440, %v437
    %v486 = vpack.c.b16 %v441, %v438
    %v487 = vpack.c.b16 %v445, %v442
    %v488 = vpack.c.b16 %v446, %v443
    %v489 = vpack.c.b16 %v447, %v444
    %v490 = vpack.c.b16 %v451, %v448
    %v491 = vpack.c.b16 %v452, %v449
    %v492 = vpack.c.b16 %v453, %v450
    %v493 = vpack.c.b16 %v457, %v454
    %v494 = vpack.c.b16 %v458, %v455
    %v495 = vpack.c.b16 %v459, %v456
    %v496 = vpack.c.b16 %v463, %v460
    %v497 = vpack.c.b16 %v464, %v461
    %v498 = vpack.c.b16 %v465, %v462
    %v499 = vpack.c.b16 %v469, %v466
    %v500 = vpack.c.b16 %v470, %v467
    %v501 = vpack.c.b16 %v471, %v468
    %v502 = vpack.c.b16 %v475, %v472
    %v503 = vpack.c.b16 %v476, %v473
    %v504 = vpack.c.b16 %v477, %v474
    %v505 = vpack.c.b16 %v481, %v478
    %v506 = vpack.c.b16 %v482, %v479
    %v507 = vpack.c.b16 %v483, %v480
    %532 = vmatprep.subr.bf16.mxu0 %v485
    %533 = vmatpush1.bf16.msra.mxu0 %v484
    %534 = vmatprep.subr.bf16.mxu0 %v488
    %535 = vmatpush1.bf16.msra.mxu0 %v487
    %536 = vmatprep.subr.bf16.mxu0 %v491
    %537 = vmatpush1.bf16.msra.mxu0 %v490
    %538 = vmatprep.subr.bf16.mxu0 %v494
    %539 = vmatpush1.bf16.msra.mxu0 %v493
    %540 = vmatprep.subr.bf16.mxu0 %v497
    %541 = vmatpush1.bf16.msra.mxu0 %v496
    %542 = vmatprep.subr.bf16.mxu0 %v500
    %543 = vmatpush1.bf16.msra.mxu0 %v499
    %544 = vmatprep.subr.bf16.mxu0 %v503
    %545 = vmatpush1.bf16.msra.mxu0 %v502
    %546 = vmatprep.subr.bf16.mxu0 %v506
    %547 = vmatpush1.bf16.msra.mxu0 %v505
    %548 = vmatprep.subr.bf16.mxu0 0
    %549 = vmatpush1.bf16.msra.mxu0 0
    %550 = vmatprep.subr.bf16.mxu0 0
    %551 = vmatpush1.bf16.msra.mxu0 0
    %552 = vmatprep.subr.bf16.mxu0 0
    %553 = vmatpush1.bf16.msra.mxu0 0
    %554 = vmatprep.subr.bf16.mxu0 0
    %555 = vmatpush1.bf16.msra.mxu0 0
    %556 = vmatprep.subr.bf16.mxu0 0
    %557 = vmatpush1.bf16.msra.mxu0 0
    %558 = vmatprep.subr.bf16.mxu0 0
    %559 = vmatpush1.bf16.msra.mxu0 0
    %560 = vmatprep.subr.bf16.mxu0 0
    %561 = vmatpush1.bf16.msra.mxu0 0
    %562 = vmatprep.subr.bf16.mxu0 0
    %563 = vmatpush1.bf16.msra.mxu0 0
    %564 = vmatprep.mubr.bf16.mxu0 0
    %565 = vmatmul.mubr.bf16.gmra.mrb[0].mxu0 %v354
    %v566 = vpop.f32.mrb[0].mxu0
    %v567 = vadd.f32 %v392, %v566
    %v568 = vpop.f32.mrb[0].mxu0
    %v569 = vadd.f32 %v396, %v568
    %v570 = vpop.f32.mrb[0].mxu0
    %v571 = vadd.f32 %v392, %v570
    %v572 = vpop.f32.mrb[0].mxu0
    %v573 = vadd.f32 %v396, %v572
    %574 = vdwg.mxu0
    %575 = vmatprep.subr.bf16.mxu0 0
    %576 = vmatpush1.bf16.msra.mxu0 %v486
    %577 = vmatprep.subr.bf16.mxu0 0
    %578 = vmatpush1.bf16.msra.mxu0 %v489
    %579 = vmatprep.subr.bf16.mxu0 0
    %580 = vmatpush1.bf16.msra.mxu0 %v492
    %581 = vmatprep.subr.bf16.mxu0 0
    %582 = vmatpush1.bf16.msra.mxu0 %v495
    %583 = vmatprep.subr.bf16.mxu0 0
    %584 = vmatpush1.bf16.msra.mxu0 %v498
    %585 = vmatprep.subr.bf16.mxu0 0
    %586 = vmatpush1.bf16.msra.mxu0 %v501
    %587 = vmatprep.subr.bf16.mxu0 0
    %588 = vmatpush1.bf16.msra.mxu0 %v504
    %589 = vmatprep.subr.bf16.mxu0 0
    %590 = vmatpush1.bf16.msra.mxu0 %v507
    %591 = vmatprep.subr.bf16.mxu0 0
    %592 = vmatpush1.bf16.msra.mxu0 0
    %593 = vmatprep.subr.bf16.mxu0 0
    %594 = vmatpush1.bf16.msra.mxu0 0
    %595 = vmatprep.subr.bf16.mxu0 0
    %596 = vmatpush1.bf16.msra.mxu0 0
    %597 = vmatprep.subr.bf16.mxu0 0
    %598 = vmatpush1.bf16.msra.mxu0 0
    %599 = vmatprep.subr.bf16.mxu0 0
    %600 = vmatpush1.bf16.msra.mxu0 0
    %601 = vmatprep.subr.bf16.mxu0 0
    %602 = vmatpush1.bf16.msra.mxu0 0
    %603 = vmatprep.subr.bf16.mxu0 0
    %604 = vmatpush1.bf16.msra.mxu0 0
    %605 = vmatprep.subr.bf16.mxu0 0
    %606 = vmatpush1.bf16.msra.mxu0 0
    %607 = vmatprep.mubr.bf16.mxu0 0
    %608 = vmatmul.mubr.bf16.gmra.mrb[0].mxu0 %v354
    %v609 = vpop.f32.mrb[0].mxu0
    %v610 = vadd.f32 %v400, %v609
    %v611 = vpop.f32.mrb[0].mxu0
    %v612 = vpop.f32.mrb[0].mxu0
    %v613 = vadd.f32 %v400, %v612
    %v614 = vpop.f32.mrb[0].mxu0
    %615 = vdwg.mxu0
    %v616 = vtanh.pop %v567
    %v617 = vtanh.pop %v569
    %v618 = vtanh.pop %v610
    %v619 = vtanh.pop %v571
    %v620 = vtanh.pop %v573
    %v621 = vtanh.pop %v613
    %v622 = vpack.c.bf16 %v619, %v616
    %v623 = vpack.c.bf16 %v620, %v617
    %v624 = vpack.c.bf16 %v621, %v618
    %v625 = vld [vmem:[#allocation4] sm:$0xff]
    %v626 = vld [vmem:[#allocation4 + $0x8] sm:$0xff]
    %v627 = vld [vmem:[#allocation4 + $0x10] sm:$0xff]
    %v628 = vld [vmem:[#allocation4 + $0x18] sm:$0xff]
    %v629 = vld [vmem:[#allocation4 + $0x20] sm:$0xff]
    %v630 = vld [vmem:[#allocation4 + $0x28] sm:$0xff]
    %v631 = vld [vmem:[#allocation4 + $0x30] sm:$0xff]
    %v632 = vld [vmem:[#allocation4 + $0x38] sm:$0xff]
    %v633 = vld [vmem:[#allocation4 + $0x40] sm:$0xff]
    %v634 = vld [vmem:[#allocation4 + $0x48] sm:$0xff]
    %v635 = vld [vmem:[#allocation4 + $0x50] sm:$0xff]
    %v636 = vld [vmem:[#allocation4 + $0x58] sm:$0xff]
    %v637 = vld [vmem:[#allocation4 + $0x60] sm:$0xff]
    %v638 = vld [vmem:[#allocation4 + $0x68] sm:$0xff]
    %v639 = vld [vmem:[#allocation4 + $0x70] sm:$0xff]
    %v640 = vld [vmem:[#allocation4 + $0x78] sm:$0xff]
    %v641 = vld [vmem:[#allocation4 + $0x80] sm:$0xff]
    %v642 = vld [vmem:[#allocation4 + $0x88] sm:$0xff]
    %v643 = vld [vmem:[#allocation4 + $0x90] sm:$0xff]
    %v644 = vld [vmem:[#allocation4 + $0x98] sm:$0xff]
    %v645 = vld [vmem:[#allocation4 + $0xa0] sm:$0xff]
    %v646 = vld [vmem:[#allocation4 + $0xa8] sm:$0xff]
    %v647 = vld [vmem:[#allocation4 + $0xb0] sm:$0xff]
    %v648 = vld [vmem:[#allocation4 + $0xb8] sm:$0xff]
    %v649 = vld [vmem:[#allocation4 + $0xc0] sm:$0xff]
    %v650 = vld [vmem:[#allocation4 + $0xc8] sm:$0xff]
    %v651 = vld [vmem:[#allocation4 + $0xd0] sm:$0xff]
    %v652 = vld [vmem:[#allocation4 + $0xd8] sm:$0xff]
    %v653 = vld [vmem:[#allocation4 + $0xe0] sm:$0xff]
    %v654 = vld [vmem:[#allocation4 + $0xe8] sm:$0xff]
    %v655 = vld [vmem:[#allocation4 + $0xf0] sm:$0xff]
    %v656 = vld [vmem:[#allocation4 + $0xf8] sm:$0xff]
    %v657 = vld [vmem:[#allocation4 + $0x100] sm:$0xff]
    %v658 = vld [vmem:[#allocation4 + $0x108] sm:$0xff]
    %v659 = vld [vmem:[#allocation4 + $0x110] sm:$0xff]
    %v660 = vld [vmem:[#allocation4 + $0x118] sm:$0xff]
    %v661 = vld [vmem:[#allocation4 + $0x120] sm:$0xff]
    %v662 = vld [vmem:[#allocation4 + $0x128] sm:$0xff]
    %v663 = vld [vmem:[#allocation4 + $0x130] sm:$0xff]
    %v664 = vld [vmem:[#allocation4 + $0x138] sm:$0xff]
    %v665 = vld [vmem:[#allocation4 + $0x140] sm:$0xff]
    %v666 = vld [vmem:[#allocation4 + $0x148] sm:$0xff]
    %v667 = vld [vmem:[#allocation4 + $0x150] sm:$0xff]
    %v668 = vld [vmem:[#allocation4 + $0x158] sm:$0xff]
    %v669 = vld [vmem:[#allocation4 + $0x160] sm:$0xff]
    %v670 = vld [vmem:[#allocation4 + $0x168] sm:$0xff]
    %v671 = vld [vmem:[#allocation4 + $0x170] sm:$0xff]
    %v672 = vld [vmem:[#allocation4 + $0x178] sm:$0xff]
    %v673 = vld [vmem:[#allocation4 + $0x180] sm:$0xff]
    %v674 = vld [vmem:[#allocation4 + $0x188] sm:$0xff]
    %v675 = vld [vmem:[#allocation4 + $0x190] sm:$0xff]
    %v676 = vld [vmem:[#allocation4 + $0x198] sm:$0xff]
    %v677 = vld [vmem:[#allocation4 + $0x1a0] sm:$0xff]
    %v678 = vld [vmem:[#allocation4 + $0x1a8] sm:$0xff]
    %v679 = vld [vmem:[#allocation4 + $0x1b0] sm:$0xff]
    %v680 = vld [vmem:[#allocation4 + $0x1b8] sm:$0xff]
    %v681 = vld [vmem:[#allocation4 + $0x1c0] sm:$0xff]
    %v682 = vld [vmem:[#allocation4 + $0x1c8] sm:$0xff]
    %v683 = vld [vmem:[#allocation4 + $0x1d0] sm:$0xff]
    %v684 = vld [vmem:[#allocation4 + $0x1d8] sm:$0xff]
    %v685 = vld [vmem:[#allocation4 + $0x1e0] sm:$0xff]
    %v686 = vld [vmem:[#allocation4 + $0x1e8] sm:$0xff]
    %v687 = vld [vmem:[#allocation4 + $0x1f0] sm:$0xff]
    %v688 = vld [vmem:[#allocation4 + $0x1f8] sm:$0xff]
    %v689 = vld [vmem:[#allocation4 + $0x200] sm:$0xff]
    %v690 = vld [vmem:[#allocation4 + $0x208] sm:$0xff]
    %v691 = vld [vmem:[#allocation4 + $0x210] sm:$0xff]
    %v692 = vld [vmem:[#allocation4 + $0x218] sm:$0xff]
    %v693 = vld [vmem:[#allocation4 + $0x220] sm:$0xff]
    %v694 = vld [vmem:[#allocation4 + $0x228] sm:$0xff]
    %v695 = vld [vmem:[#allocation4 + $0x230] sm:$0xff]
    %v696 = vld [vmem:[#allocation4 + $0x238] sm:$0xff]
    %v697 = vld [vmem:[#allocation4 + $0x240] sm:$0xff]
    %v698 = vld [vmem:[#allocation4 + $0x248] sm:$0xff]
    %v699 = vld [vmem:[#allocation4 + $0x250] sm:$0xff]
    %v700 = vld [vmem:[#allocation4 + $0x258] sm:$0xff]
    %v701 = vld [vmem:[#allocation4 + $0x260] sm:$0xff]
    %v702 = vld [vmem:[#allocation4 + $0x268] sm:$0xff]
    %v703 = vld [vmem:[#allocation4 + $0x270] sm:$0xff]
    %v704 = vld [vmem:[#allocation4 + $0x278] sm:$0xff]
    %v705 = vld [vmem:[#allocation4 + $0x280] sm:$0xff]
    %v706 = vld [vmem:[#allocation4 + $0x288] sm:$0xff]
    %v707 = vld [vmem:[#allocation4 + $0x290] sm:$0xff]
    %v708 = vld [vmem:[#allocation4 + $0x298] sm:$0xff]
    %v709 = vld [vmem:[#allocation4 + $0x2a0] sm:$0xff]
    %v710 = vld [vmem:[#allocation4 + $0x2a8] sm:$0xff]
    %v711 = vld [vmem:[#allocation4 + $0x2b0] sm:$0xff]
    %v712 = vld [vmem:[#allocation4 + $0x2b8] sm:$0xff]
    %v713 = vld [vmem:[#allocation4 + $0x2c0] sm:$0xff]
    %v714 = vld [vmem:[#allocation4 + $0x2c8] sm:$0xff]
    %v715 = vld [vmem:[#allocation4 + $0x2d0] sm:$0xff]
    %v716 = vld [vmem:[#allocation4 + $0x2d8] sm:$0xff]
    %v717 = vld [vmem:[#allocation4 + $0x2e0] sm:$0xff]
    %v718 = vld [vmem:[#allocation4 + $0x2e8] sm:$0xff]
    %v719 = vld [vmem:[#allocation4 + $0x2f0] sm:$0xff]
    %v720 = vld [vmem:[#allocation4 + $0x2f8] sm:$0xff]
    %v721 = vld [vmem:[%s6] sm:$0xf]
    %v723 = vlaneseq
    %v724 = vshrl.u32 %v723, 7
    %v725 = vsub.s32 0, %v724
    %v726 = vrot.slane %v721, %v725
    %v727 = vlaneseq
    %v728 = vshrl.u32 %v727, 7
    %v729 = vsub.s32 1, %v728
    %v730 = vrot.slane %v721, %v729
    %v731 = vlaneseq
    %v732 = vshrl.u32 %v731, 7
    %v733 = vsub.s32 2, %v732
    %v734 = vrot.slane %v721, %v733
    %v735 = vlaneseq
    %v736 = vshrl.u32 %v735, 7
    %v737 = vsub.s32 3, %v736
    %v738 = vrot.slane %v721, %v737
    %v839 = vunpack.c.l.b16 %v625
    %v840 = vunpack.c.h.b16 %v625
    %v841 = vunpack.c.l.b16 %v626
    %v842 = vunpack.c.h.b16 %v626
    %v843 = vunpack.c.l.b16 %v627
    %v844 = vunpack.c.h.b16 %v627
    %v845 = vunpack.c.l.b16 %v628
    %v846 = vunpack.c.h.b16 %v628
    %v847 = vunpack.c.l.b16 %v629
    %v848 = vunpack.c.h.b16 %v629
    %v849 = vunpack.c.l.b16 %v630
    %v850 = vunpack.c.h.b16 %v630
    %v851 = vunpack.c.l.b16 %v631
    %v852 = vunpack.c.h.b16 %v631
    %v853 = vunpack.c.l.b16 %v632
    %v854 = vunpack.c.h.b16 %v632
    %v855 = vunpack.c.l.b16 %v633
    %v856 = vunpack.c.h.b16 %v633
    %v857 = vunpack.c.l.b16 %v634
    %v858 = vunpack.c.h.b16 %v634
    %v859 = vunpack.c.l.b16 %v635
    %v860 = vunpack.c.h.b16 %v635
    %v861 = vunpack.c.l.b16 %v636
    %v862 = vunpack.c.h.b16 %v636
    %v863 = vunpack.c.l.b16 %v637
    %v864 = vunpack.c.h.b16 %v637
    %v865 = vunpack.c.l.b16 %v638
    %v866 = vunpack.c.h.b16 %v638
    %v867 = vunpack.c.l.b16 %v639
    %v868 = vunpack.c.h.b16 %v639
    %v869 = vunpack.c.l.b16 %v640
    %v870 = vunpack.c.h.b16 %v640
    %v871 = vunpack.c.l.b16 %v641
    %v872 = vunpack.c.h.b16 %v641
    %v873 = vunpack.c.l.b16 %v642
    %v874 = vunpack.c.h.b16 %v642
    %v875 = vunpack.c.l.b16 %v643
    %v876 = vunpack.c.h.b16 %v643
    %v877 = vunpack.c.l.b16 %v644
    %v878 = vunpack.c.h.b16 %v644
    %v879 = vunpack.c.l.b16 %v645
    %v880 = vunpack.c.h.b16 %v645
    %v881 = vunpack.c.l.b16 %v646
    %v882 = vunpack.c.h.b16 %v646
    %v883 = vunpack.c.l.b16 %v647
    %v884 = vunpack.c.h.b16 %v647
    %v885 = vunpack.c.l.b16 %v648
    %v886 = vunpack.c.h.b16 %v648
    %v887 = vunpack.c.l.b16 %v649
    %v888 = vunpack.c.h.b16 %v649
    %v889 = vunpack.c.l.b16 %v650
    %v890 = vunpack.c.h.b16 %v650
    %v891 = vunpack.c.l.b16 %v651
    %v892 = vunpack.c.h.b16 %v651
    %v893 = vunpack.c.l.b16 %v652
    %v894 = vunpack.c.h.b16 %v652
    %v895 = vunpack.c.l.b16 %v653
    %v896 = vunpack.c.h.b16 %v653
    %v897 = vunpack.c.l.b16 %v654
    %v898 = vunpack.c.h.b16 %v654
    %v899 = vunpack.c.l.b16 %v655
    %v900 = vunpack.c.h.b16 %v655
    %v901 = vunpack.c.l.b16 %v656
    %v902 = vunpack.c.h.b16 %v656
    %v903 = vunpack.c.l.b16 %v657
    %v904 = vunpack.c.h.b16 %v657
    %v905 = vunpack.c.l.b16 %v658
    %v906 = vunpack.c.h.b16 %v658
    %v907 = vunpack.c.l.b16 %v659
    %v908 = vunpack.c.h.b16 %v659
    %v909 = vunpack.c.l.b16 %v660
    %v910 = vunpack.c.h.b16 %v660
    %v911 = vunpack.c.l.b16 %v661
    %v912 = vunpack.c.h.b16 %v661
    %v913 = vunpack.c.l.b16 %v662
    %v914 = vunpack.c.h.b16 %v662
    %v915 = vunpack.c.l.b16 %v663
    %v916 = vunpack.c.h.b16 %v663
    %v917 = vunpack.c.l.b16 %v664
    %v918 = vunpack.c.h.b16 %v664
    %v919 = vunpack.c.l.b16 %v665
    %v920 = vunpack.c.h.b16 %v665
    %v921 = vunpack.c.l.b16 %v666
    %v922 = vunpack.c.h.b16 %v666
    %v923 = vunpack.c.l.b16 %v667
    %v924 = vunpack.c.h.b16 %v667
    %v925 = vunpack.c.l.b16 %v668
    %v926 = vunpack.c.h.b16 %v668
    %v927 = vunpack.c.l.b16 %v669
    %v928 = vunpack.c.h.b16 %v669
    %v929 = vunpack.c.l.b16 %v670
    %v930 = vunpack.c.h.b16 %v670
    %v931 = vunpack.c.l.b16 %v671
    %v932 = vunpack.c.h.b16 %v671
    %v933 = vunpack.c.l.b16 %v672
    %v934 = vunpack.c.h.b16 %v672
    %v935 = vunpack.c.l.b16 %v673
    %v936 = vunpack.c.h.b16 %v673
    %v937 = vunpack.c.l.b16 %v674
    %v938 = vunpack.c.h.b16 %v674
    %v939 = vunpack.c.l.b16 %v675
    %v940 = vunpack.c.h.b16 %v675
    %v941 = vunpack.c.l.b16 %v676
    %v942 = vunpack.c.h.b16 %v676
    %v943 = vunpack.c.l.b16 %v677
    %v944 = vunpack.c.h.b16 %v677
    %v945 = vunpack.c.l.b16 %v678
    %v946 = vunpack.c.h.b16 %v678
    %v947 = vunpack.c.l.b16 %v679
    %v948 = vunpack.c.h.b16 %v679
    %v949 = vunpack.c.l.b16 %v680
    %v950 = vunpack.c.h.b16 %v680
    %v951 = vunpack.c.l.b16 %v681
    %v952 = vunpack.c.h.b16 %v681
    %v953 = vunpack.c.l.b16 %v682
    %v954 = vunpack.c.h.b16 %v682
    %v955 = vunpack.c.l.b16 %v683
    %v956 = vunpack.c.h.b16 %v683
    %v957 = vunpack.c.l.b16 %v684
    %v958 = vunpack.c.h.b16 %v684
    %v959 = vunpack.c.l.b16 %v685
    %v960 = vunpack.c.h.b16 %v685
    %v961 = vunpack.c.l.b16 %v686
    %v962 = vunpack.c.h.b16 %v686
    %v963 = vunpack.c.l.b16 %v687
    %v964 = vunpack.c.h.b16 %v687
    %v965 = vunpack.c.l.b16 %v688
    %v966 = vunpack.c.h.b16 %v688
    %v967 = vunpack.c.l.b16 %v689
    %v968 = vunpack.c.h.b16 %v689
    %v969 = vunpack.c.l.b16 %v690
    %v970 = vunpack.c.h.b16 %v690
    %v971 = vunpack.c.l.b16 %v691
    %v972 = vunpack.c.h.b16 %v691
    %v973 = vunpack.c.l.b16 %v692
    %v974 = vunpack.c.h.b16 %v692
    %v975 = vunpack.c.l.b16 %v693
    %v976 = vunpack.c.h.b16 %v693
    %v977 = vunpack.c.l.b16 %v694
    %v978 = vunpack.c.h.b16 %v694
    %v979 = vunpack.c.l.b16 %v695
    %v980 = vunpack.c.h.b16 %v695
    %v981 = vunpack.c.l.b16 %v696
    %v982 = vunpack.c.h.b16 %v696
    %v983 = vunpack.c.l.b16 %v697
    %v984 = vunpack.c.h.b16 %v697
    %v985 = vunpack.c.l.b16 %v698
    %v986 = vunpack.c.h.b16 %v698
    %v987 = vunpack.c.l.b16 %v699
    %v988 = vunpack.c.h.b16 %v699
    %v989 = vunpack.c.l.b16 %v700
    %v990 = vunpack.c.h.b16 %v700
    %v991 = vunpack.c.l.b16 %v701
    %v992 = vunpack.c.h.b16 %v701
    %v993 = vunpack.c.l.b16 %v702
    %v994 = vunpack.c.h.b16 %v702
    %v995 = vunpack.c.l.b16 %v703
    %v996 = vunpack.c.h.b16 %v703
    %v997 = vunpack.c.l.b16 %v704
    %v998 = vunpack.c.h.b16 %v704
    %v999 = vunpack.c.l.b16 %v705
    %v1000 = vunpack.c.h.b16 %v705
    %v1001 = vunpack.c.l.b16 %v706
    %v1002 = vunpack.c.h.b16 %v706
    %v1003 = vunpack.c.l.b16 %v707
    %v1004 = vunpack.c.h.b16 %v707
    %v1005 = vunpack.c.l.b16 %v708
    %v1006 = vunpack.c.h.b16 %v708
    %v1007 = vunpack.c.l.b16 %v709
    %v1008 = vunpack.c.h.b16 %v709
    %v1009 = vunpack.c.l.b16 %v710
    %v1010 = vunpack.c.h.b16 %v710
    %v1011 = vunpack.c.l.b16 %v711
    %v1012 = vunpack.c.h.b16 %v711
    %v1013 = vunpack.c.l.b16 %v712
    %v1014 = vunpack.c.h.b16 %v712
    %v1015 = vunpack.c.l.b16 %v713
    %v1016 = vunpack.c.h.b16 %v713
    %v1017 = vunpack.c.l.b16 %v714
    %v1018 = vunpack.c.h.b16 %v714
    %v1019 = vunpack.c.l.b16 %v715
    %v1020 = vunpack.c.h.b16 %v715
    %v1021 = vunpack.c.l.b16 %v716
    %v1022 = vunpack.c.h.b16 %v716
    %v1023 = vunpack.c.l.b16 %v717
    %v1024 = vunpack.c.h.b16 %v717
    %v1025 = vunpack.c.l.b16 %v718
    %v1026 = vunpack.c.h.b16 %v718
    %v1027 = vunpack.c.l.b16 %v719
    %v1028 = vunpack.c.h.b16 %v719
    %v1029 = vunpack.c.l.b16 %v720
    %v1030 = vunpack.c.h.b16 %v720
    %v1031 = vpack.c.b16 %v843, %v839
    %v1032 = vpack.c.b16 %v844, %v840
    %v1033 = vpack.c.b16 %v845, %v841
    %v1034 = vpack.c.b16 %v846, %v842
    %v1035 = vpack.c.b16 %v851, %v847
    %v1036 = vpack.c.b16 %v852, %v848
    %v1037 = vpack.c.b16 %v853, %v849
    %v1038 = vpack.c.b16 %v854, %v850
    %v1039 = vpack.c.b16 %v859, %v855
    %v1040 = vpack.c.b16 %v860, %v856
    %v1041 = vpack.c.b16 %v861, %v857
    %v1042 = vpack.c.b16 %v862, %v858
    %v1043 = vpack.c.b16 %v867, %v863
    %v1044 = vpack.c.b16 %v868, %v864
    %v1045 = vpack.c.b16 %v869, %v865
    %v1046 = vpack.c.b16 %v870, %v866
    %v1047 = vpack.c.b16 %v875, %v871
    %v1048 = vpack.c.b16 %v876, %v872
    %v1049 = vpack.c.b16 %v877, %v873
    %v1050 = vpack.c.b16 %v878, %v874
    %v1051 = vpack.c.b16 %v883, %v879
    %v1052 = vpack.c.b16 %v884, %v880
    %v1053 = vpack.c.b16 %v885, %v881
    %v1054 = vpack.c.b16 %v886, %v882
    %v1055 = vpack.c.b16 %v891, %v887
    %v1056 = vpack.c.b16 %v892, %v888
    %v1057 = vpack.c.b16 %v893, %v889
    %v1058 = vpack.c.b16 %v894, %v890
    %v1059 = vpack.c.b16 %v899, %v895
    %v1060 = vpack.c.b16 %v900, %v896
    %v1061 = vpack.c.b16 %v901, %v897
    %v1062 = vpack.c.b16 %v902, %v898
    %v1063 = vpack.c.b16 %v907, %v903
    %v1064 = vpack.c.b16 %v908, %v904
    %v1065 = vpack.c.b16 %v909, %v905
    %v1066 = vpack.c.b16 %v910, %v906
    %v1067 = vpack.c.b16 %v915, %v911
    %v1068 = vpack.c.b16 %v916, %v912
    %v1069 = vpack.c.b16 %v917, %v913
    %v1070 = vpack.c.b16 %v918, %v914
    %v1071 = vpack.c.b16 %v923, %v919
    %v1072 = vpack.c.b16 %v924, %v920
    %v1073 = vpack.c.b16 %v925, %v921
    %v1074 = vpack.c.b16 %v926, %v922
    %v1075 = vpack.c.b16 %v931, %v927
    %v1076 = vpack.c.b16 %v932, %v928
    %v1077 = vpack.c.b16 %v933, %v929
    %v1078 = vpack.c.b16 %v934, %v930
    %v1079 = vpack.c.b16 %v939, %v935
    %v1080 = vpack.c.b16 %v940, %v936
    %v1081 = vpack.c.b16 %v941, %v937
    %v1082 = vpack.c.b16 %v942, %v938
    %v1083 = vpack.c.b16 %v947, %v943
    %v1084 = vpack.c.b16 %v948, %v944
    %v1085 = vpack.c.b16 %v949, %v945
    %v1086 = vpack.c.b16 %v950, %v946
    %v1087 = vpack.c.b16 %v955, %v951
    %v1088 = vpack.c.b16 %v956, %v952
    %v1089 = vpack.c.b16 %v957, %v953
    %v1090 = vpack.c.b16 %v958, %v954
    %v1091 = vpack.c.b16 %v963, %v959
    %v1092 = vpack.c.b16 %v964, %v960
    %v1093 = vpack.c.b16 %v965, %v961
    %v1094 = vpack.c.b16 %v966, %v962
    %v1095 = vpack.c.b16 %v971, %v967
    %v1096 = vpack.c.b16 %v972, %v968
    %v1097 = vpack.c.b16 %v973, %v969
    %v1098 = vpack.c.b16 %v974, %v970
    %v1099 = vpack.c.b16 %v979, %v975
    %v1100 = vpack.c.b16 %v980, %v976
    %v1101 = vpack.c.b16 %v981, %v977
    %v1102 = vpack.c.b16 %v982, %v978
    %v1103 = vpack.c.b16 %v987, %v983
    %v1104 = vpack.c.b16 %v988, %v984
    %v1105 = vpack.c.b16 %v989, %v985
    %v1106 = vpack.c.b16 %v990, %v986
    %v1107 = vpack.c.b16 %v995, %v991
    %v1108 = vpack.c.b16 %v996, %v992
    %v1109 = vpack.c.b16 %v997, %v993
    %v1110 = vpack.c.b16 %v998, %v994
    %v1111 = vpack.c.b16 %v1003, %v999
    %v1112 = vpack.c.b16 %v1004, %v1000
    %v1113 = vpack.c.b16 %v1005, %v1001
    %v1114 = vpack.c.b16 %v1006, %v1002
    %v1115 = vpack.c.b16 %v1011, %v1007
    %v1116 = vpack.c.b16 %v1012, %v1008
    %v1117 = vpack.c.b16 %v1013, %v1009
    %v1118 = vpack.c.b16 %v1014, %v1010
    %v1119 = vpack.c.b16 %v1019, %v1015
    %v1120 = vpack.c.b16 %v1020, %v1016
    %v1121 = vpack.c.b16 %v1021, %v1017
    %v1122 = vpack.c.b16 %v1022, %v1018
    %v1123 = vpack.c.b16 %v1027, %v1023
    %v1124 = vpack.c.b16 %v1028, %v1024
    %v1125 = vpack.c.b16 %v1029, %v1025
    %v1126 = vpack.c.b16 %v1030, %v1026
    %1223 = vmatprep.subr.bf16.mxu0 %v1032
    %1224 = vmatpush1.bf16.msra.mxu0 %v1031
    %1225 = vmatprep.subr.bf16.mxu0 %v1036
    %1226 = vmatpush1.bf16.msra.mxu0 %v1035
    %1227 = vmatprep.subr.bf16.mxu0 %v1040
    %1228 = vmatpush1.bf16.msra.mxu0 %v1039
    %1229 = vmatprep.subr.bf16.mxu0 %v1044
    %1230 = vmatpush1.bf16.msra.mxu0 %v1043
    %1231 = vmatprep.subr.bf16.mxu0 %v1048
    %1232 = vmatpush1.bf16.msra.mxu0 %v1047
    %1233 = vmatprep.subr.bf16.mxu0 %v1052
    %1234 = vmatpush1.bf16.msra.mxu0 %v1051
    %1235 = vmatprep.subr.bf16.mxu0 %v1056
    %1236 = vmatpush1.bf16.msra.mxu0 %v1055
    %1237 = vmatprep.subr.bf16.mxu0 %v1060
    %1238 = vmatpush1.bf16.msra.mxu0 %v1059
    %1239 = vmatprep.subr.bf16.mxu0 %v1064
    %1240 = vmatpush1.bf16.msra.mxu0 %v1063
    %1241 = vmatprep.subr.bf16.mxu0 %v1068
    %1242 = vmatpush1.bf16.msra.mxu0 %v1067
    %1243 = vmatprep.subr.bf16.mxu0 %v1072
    %1244 = vmatpush1.bf16.msra.mxu0 %v1071
    %1245 = vmatprep.subr.bf16.mxu0 %v1076
    %1246 = vmatpush1.bf16.msra.mxu0 %v1075
    %1247 = vmatprep.subr.bf16.mxu0 %v1080
    %1248 = vmatpush1.bf16.msra.mxu0 %v1079
    %1249 = vmatprep.subr.bf16.mxu0 %v1084
    %1250 = vmatpush1.bf16.msra.mxu0 %v1083
    %1251 = vmatprep.subr.bf16.mxu0 %v1088
    %1252 = vmatpush1.bf16.msra.mxu0 %v1087
    %1253 = vmatprep.subr.bf16.mxu0 %v1092
    %1254 = vmatpush1.bf16.msra.mxu0 %v1091
    %1255 = vmatprep.mubr.bf16.mxu0 %v623
    %1256 = vmatmul.mubr.bf16.gmra.mrb[0].mxu0 %v622
    %v1257 = vpop.f32.mrb[0].mxu0
    %v1258 = vadd.f32 %v726, %v1257
    %v1259 = vpop.f32.mrb[0].mxu0
    %v1260 = vadd.f32 %v730, %v1259
    %v1261 = vpop.f32.mrb[0].mxu0
    %v1262 = vadd.f32 %v726, %v1261
    %v1263 = vpop.f32.mrb[0].mxu0
    %v1264 = vadd.f32 %v730, %v1263
    %1265 = vdwg.mxu0
    %1266 = vmatprep.subr.bf16.mxu0 %v1096
    %1267 = vmatpush1.bf16.msra.mxu0 %v1095
    %1268 = vmatprep.subr.bf16.mxu0 %v1100
    %1269 = vmatpush1.bf16.msra.mxu0 %v1099
    %1270 = vmatprep.subr.bf16.mxu0 %v1104
    %1271 = vmatpush1.bf16.msra.mxu0 %v1103
    %1272 = vmatprep.subr.bf16.mxu0 %v1108
    %1273 = vmatpush1.bf16.msra.mxu0 %v1107
    %1274 = vmatprep.subr.bf16.mxu0 %v1112
    %1275 = vmatpush1.bf16.msra.mxu0 %v1111
    %1276 = vmatprep.subr.bf16.mxu0 %v1116
    %1277 = vmatpush1.bf16.msra.mxu0 %v1115
    %1278 = vmatprep.subr.bf16.mxu0 %v1120
    %1279 = vmatpush1.bf16.msra.mxu0 %v1119
    %1280 = vmatprep.subr.bf16.mxu0 %v1124
    %1281 = vmatpush1.bf16.msra.mxu0 %v1123
    %1282 = vmatprep.subr.bf16.mxu0 0
    %1283 = vmatpush1.bf16.msra.mxu0 0
    %1284 = vmatprep.subr.bf16.mxu0 0
    %1285 = vmatpush1.bf16.msra.mxu0 0
    %1286 = vmatprep.subr.bf16.mxu0 0
    %1287 = vmatpush1.bf16.msra.mxu0 0
    %1288 = vmatprep.subr.bf16.mxu0 0
    %1289 = vmatpush1.bf16.msra.mxu0 0
    %1290 = vmatprep.subr.bf16.mxu0 0
    %1291 = vmatpush1.bf16.msra.mxu0 0
    %1292 = vmatprep.subr.bf16.mxu0 0
    %1293 = vmatpush1.bf16.msra.mxu0 0
    %1294 = vmatprep.subr.bf16.mxu0 0
    %1295 = vmatpush1.bf16.msra.mxu0 0
    %1296 = vmatprep.subr.bf16.mxu0 0
    %1297 = vmatpush1.bf16.msra.mxu0 0
    %1298 = vmatprep.mubr.bf16.mxu0 0
    %1299 = vmatmul.mubr.bf16.gmra.mrb[0].mxu0 %v624
    %v1300 = vpop.f32.mrb[0].mxu0
    %v1301 = vadd.f32 %v1258, %v1300
    %v1302 = vpop.f32.mrb[0].mxu0
    %v1303 = vadd.f32 %v1260, %v1302
    %v1304 = vpop.f32.mrb[0].mxu0
    %v1305 = vadd.f32 %v1262, %v1304
    %v1306 = vpop.f32.mrb[0].mxu0
    %v1307 = vadd.f32 %v1264, %v1306
    %1308 = vdwg.mxu0
    %1309 = vmatprep.subr.bf16.mxu0 %v1034
    %1310 = vmatpush1.bf16.msra.mxu0 %v1033
    %1311 = vmatprep.subr.bf16.mxu0 %v1038
    %1312 = vmatpush1.bf16.msra.mxu0 %v1037
    %1313 = vmatprep.subr.bf16.mxu0 %v1042
    %1314 = vmatpush1.bf16.msra.mxu0 %v1041
    %1315 = vmatprep.subr.bf16.mxu0 %v1046
    %1316 = vmatpush1.bf16.msra.mxu0 %v1045
    %1317 = vmatprep.subr.bf16.mxu0 %v1050
    %1318 = vmatpush1.bf16.msra.mxu0 %v1049
    %1319 = vmatprep.subr.bf16.mxu0 %v1054
    %1320 = vmatpush1.bf16.msra.mxu0 %v1053
    %1321 = vmatprep.subr.bf16.mxu0 %v1058
    %1322 = vmatpush1.bf16.msra.mxu0 %v1057
    %1323 = vmatprep.subr.bf16.mxu0 %v1062
    %1324 = vmatpush1.bf16.msra.mxu0 %v1061
    %1325 = vmatprep.subr.bf16.mxu0 %v1066
    %1326 = vmatpush1.bf16.msra.mxu0 %v1065
    %1327 = vmatprep.subr.bf16.mxu0 %v1070
    %1328 = vmatpush1.bf16.msra.mxu0 %v1069
    %1329 = vmatprep.subr.bf16.mxu0 %v1074
    %1330 = vmatpush1.bf16.msra.mxu0 %v1073
    %1331 = vmatprep.subr.bf16.mxu0 %v1078
    %1332 = vmatpush1.bf16.msra.mxu0 %v1077
    %1333 = vmatprep.subr.bf16.mxu0 %v1082
    %1334 = vmatpush1.bf16.msra.mxu0 %v1081
    %1335 = vmatprep.subr.bf16.mxu0 %v1086
    %1336 = vmatpush1.bf16.msra.mxu0 %v1085
    %1337 = vmatprep.subr.bf16.mxu0 %v1090
    %1338 = vmatpush1.bf16.msra.mxu0 %v1089
    %1339 = vmatprep.subr.bf16.mxu0 %v1094
    %1340 = vmatpush1.bf16.msra.mxu0 %v1093
    %1341 = vmatprep.mubr.bf16.mxu0 %v623
    %1342 = vmatmul.mubr.bf16.gmra.mrb[0].mxu0 %v622
    %v1343 = vpop.f32.mrb[0].mxu0
    %v1344 = vadd.f32 %v734, %v1343
    %v1345 = vpop.f32.mrb[0].mxu0
    %v1346 = vadd.f32 %v738, %v1345
    %v1347 = vpop.f32.mrb[0].mxu0
    %v1348 = vadd.f32 %v734, %v1347
    %v1349 = vpop.f32.mrb[0].mxu0
    %v1350 = vadd.f32 %v738, %v1349
    %1351 = vdwg.mxu0
    %1352 = vmatprep.subr.bf16.mxu0 %v1098
    %1353 = vmatpush1.bf16.msra.mxu0 %v1097
    %1354 = vmatprep.subr.bf16.mxu0 %v1102
    %1355 = vmatpush1.bf16.msra.mxu0 %v1101
    %1356 = vmatprep.subr.bf16.mxu0 %v1106
    %1357 = vmatpush1.bf16.msra.mxu0 %v1105
    %1358 = vmatprep.subr.bf16.mxu0 %v1110
    %1359 = vmatpush1.bf16.msra.mxu0 %v1109
    %1360 = vmatprep.subr.bf16.mxu0 %v1114
    %1361 = vmatpush1.bf16.msra.mxu0 %v1113
    %1362 = vmatprep.subr.bf16.mxu0 %v1118
    %1363 = vmatpush1.bf16.msra.mxu0 %v1117
    %1364 = vmatprep.subr.bf16.mxu0 %v1122
    %1365 = vmatpush1.bf16.msra.mxu0 %v1121
    %1366 = vmatprep.subr.bf16.mxu0 %v1126
    %1367 = vmatpush1.bf16.msra.mxu0 %v1125
    %1368 = vmatprep.subr.bf16.mxu0 0
    %1369 = vmatpush1.bf16.msra.mxu0 0
    %1370 = vmatprep.subr.bf16.mxu0 0
    %1371 = vmatpush1.bf16.msra.mxu0 0
    %1372 = vmatprep.subr.bf16.mxu0 0
    %1373 = vmatpush1.bf16.msra.mxu0 0
    %1374 = vmatprep.subr.bf16.mxu0 0
    %1375 = vmatpush1.bf16.msra.mxu0 0
    %1376 = vmatprep.subr.bf16.mxu0 0
    %1377 = vmatpush1.bf16.msra.mxu0 0
    %1378 = vmatprep.subr.bf16.mxu0 0
    %1379 = vmatpush1.bf16.msra.mxu0 0
    %1380 = vmatprep.subr.bf16.mxu0 0
    %1381 = vmatpush1.bf16.msra.mxu0 0
    %1382 = vmatprep.subr.bf16.mxu0 0
    %1383 = vmatpush1.bf16.msra.mxu0 0
    %1384 = vmatprep.mubr.bf16.mxu0 0
    %1385 = vmatmul.mubr.bf16.gmra.mrb[0].mxu0 %v624
    %v1386 = vpop.f32.mrb[0].mxu0
    %v1387 = vadd.f32 %v1344, %v1386
    %v1388 = vpop.f32.mrb[0].mxu0
    %v1389 = vadd.f32 %v1346, %v1388
    %v1390 = vpop.f32.mrb[0].mxu0
    %v1391 = vadd.f32 %v1348, %v1390
    %v1392 = vpop.f32.mrb[0].mxu0
    %v1393 = vadd.f32 %v1350, %v1392
    %1394 = vdwg.mxu0
    %v1395 = vtanh.pop %v1301
    %v1396 = vtanh.pop %v1303
    %v1397 = vtanh.pop %v1387
    %v1398 = vtanh.pop %v1389
    %v1399 = vtanh.pop %v1305
    %v1400 = vtanh.pop %v1307
    %v1401 = vtanh.pop %v1391
    %v1402 = vtanh.pop %v1393
    %v1403 = vpack.c.bf16 %v1399, %v1395
    %v1404 = vpack.c.bf16 %v1400, %v1396
    %v1405 = vpack.c.bf16 %v1401, %v1397
    %v1406 = vpack.c.bf16 %v1402, %v1398
    %v1407 = vld [vmem:[#allocation6] sm:$0xff]
    %v1408 = vld [vmem:[#allocation6 + $0x8] sm:$0xff]
    %v1409 = vld [vmem:[#allocation6 + $0x10] sm:$0xff]
    %v1410 = vld [vmem:[#allocation6 + $0x18] sm:$0xff]
    %v1411 = vld [vmem:[#allocation6 + $0x20] sm:$0xff]
    %v1412 = vld [vmem:[#allocation6 + $0x28] sm:$0xff]
    %v1413 = vld [vmem:[#allocation6 + $0x30] sm:$0xff]
    %v1414 = vld [vmem:[#allocation6 + $0x38] sm:$0xff]
    %v1415 = vld [vmem:[#allocation6 + $0x40] sm:$0xff]
    %v1416 = vld [vmem:[#allocation6 + $0x48] sm:$0xff]
    %v1417 = vld [vmem:[#allocation6 + $0x50] sm:$0xff]
    %v1418 = vld [vmem:[#allocation6 + $0x58] sm:$0xff]
    %v1419 = vld [vmem:[#allocation6 + $0x60] sm:$0xff]
    %v1420 = vld [vmem:[#allocation6 + $0x68] sm:$0xff]
    %v1421 = vld [vmem:[#allocation6 + $0x70] sm:$0xff]
    %v1422 = vld [vmem:[#allocation6 + $0x78] sm:$0xff]
    %v1423 = vld [vmem:[#allocation6 + $0x80] sm:$0xff]
    %v1424 = vld [vmem:[#allocation6 + $0x88] sm:$0xff]
    %v1425 = vld [vmem:[#allocation6 + $0x90] sm:$0xff]
    %v1426 = vld [vmem:[#allocation6 + $0x98] sm:$0xff]
    %v1427 = vld [vmem:[#allocation6 + $0xa0] sm:$0xff]
    %v1428 = vld [vmem:[#allocation6 + $0xa8] sm:$0xff]
    %v1429 = vld [vmem:[#allocation6 + $0xb0] sm:$0xff]
    %v1430 = vld [vmem:[#allocation6 + $0xb8] sm:$0xff]
    %v1431 = vld [vmem:[#allocation6 + $0xc0] sm:$0xff]
    %v1432 = vld [vmem:[#allocation6 + $0xc8] sm:$0xff]
    %v1433 = vld [vmem:[#allocation6 + $0xd0] sm:$0xff]
    %v1434 = vld [vmem:[#allocation6 + $0xd8] sm:$0xff]
    %v1435 = vld [vmem:[#allocation6 + $0xe0] sm:$0xff]
    %v1436 = vld [vmem:[#allocation6 + $0xe8] sm:$0xff]
    %v1437 = vld [vmem:[#allocation6 + $0xf0] sm:$0xff]
    %v1438 = vld [vmem:[#allocation6 + $0xf8] sm:$0xff]
    %v1439 = vld [vmem:[#allocation6 + $0x100] sm:$0xff]
    %v1440 = vld [vmem:[#allocation6 + $0x108] sm:$0xff]
    %v1441 = vld [vmem:[#allocation6 + $0x110] sm:$0xff]
    %v1442 = vld [vmem:[#allocation6 + $0x118] sm:$0xff]
    %v1443 = vld [vmem:[#allocation6 + $0x120] sm:$0xff]
    %v1444 = vld [vmem:[#allocation6 + $0x128] sm:$0xff]
    %v1445 = vld [vmem:[#allocation6 + $0x130] sm:$0xff]
    %v1446 = vld [vmem:[#allocation6 + $0x138] sm:$0xff]
    %v1447 = vld [vmem:[#allocation6 + $0x140] sm:$0xff]
    %v1448 = vld [vmem:[#allocation6 + $0x148] sm:$0xff]
    %v1449 = vld [vmem:[#allocation6 + $0x150] sm:$0xff]
    %v1450 = vld [vmem:[#allocation6 + $0x158] sm:$0xff]
    %v1451 = vld [vmem:[#allocation6 + $0x160] sm:$0xff]
    %v1452 = vld [vmem:[#allocation6 + $0x168] sm:$0xff]
    %v1453 = vld [vmem:[#allocation6 + $0x170] sm:$0xff]
    %v1454 = vld [vmem:[#allocation6 + $0x178] sm:$0xff]
    %v1455 = vld [vmem:[#allocation6 + $0x180] sm:$0xff]
    %v1456 = vld [vmem:[#allocation6 + $0x188] sm:$0xff]
    %v1457 = vld [vmem:[#allocation6 + $0x190] sm:$0xff]
    %v1458 = vld [vmem:[#allocation6 + $0x198] sm:$0xff]
    %v1459 = vld [vmem:[#allocation6 + $0x1a0] sm:$0xff]
    %v1460 = vld [vmem:[#allocation6 + $0x1a8] sm:$0xff]
    %v1461 = vld [vmem:[#allocation6 + $0x1b0] sm:$0xff]
    %v1462 = vld [vmem:[#allocation6 + $0x1b8] sm:$0xff]
    %v1463 = vld [vmem:[#allocation6 + $0x1c0] sm:$0xff]
    %v1464 = vld [vmem:[#allocation6 + $0x1c8] sm:$0xff]
    %v1465 = vld [vmem:[#allocation6 + $0x1d0] sm:$0xff]
    %v1466 = vld [vmem:[#allocation6 + $0x1d8] sm:$0xff]
    %v1467 = vld [vmem:[#allocation6 + $0x1e0] sm:$0xff]
    %v1468 = vld [vmem:[#allocation6 + $0x1e8] sm:$0xff]
    %v1469 = vld [vmem:[#allocation6 + $0x1f0] sm:$0xff]
    %v1470 = vld [vmem:[#allocation6 + $0x1f8] sm:$0xff]
    %v1471 = vld [vmem:[%s8] sm:$0x3]
    %v1473 = vlaneseq
    %v1474 = vshrl.u32 %v1473, 7
    %v1475 = vsub.s32 0, %v1474
    %v1476 = vrot.slane %v1471, %v1475
    %v1477 = vlaneseq
    %v1478 = vshrl.u32 %v1477, 7
    %v1479 = vsub.s32 1, %v1478
    %v1480 = vrot.slane %v1471, %v1479
    %v1547 = vunpack.c.l.b16 %v1407
    %v1548 = vunpack.c.h.b16 %v1407
    %v1549 = vunpack.c.l.b16 %v1408
    %v1550 = vunpack.c.h.b16 %v1408
    %v1551 = vunpack.c.l.b16 %v1409
    %v1552 = vunpack.c.h.b16 %v1409
    %v1553 = vunpack.c.l.b16 %v1410
    %v1554 = vunpack.c.h.b16 %v1410
    %v1555 = vunpack.c.l.b16 %v1411
    %v1556 = vunpack.c.h.b16 %v1411
    %v1557 = vunpack.c.l.b16 %v1412
    %v1558 = vunpack.c.h.b16 %v1412
    %v1559 = vunpack.c.l.b16 %v1413
    %v1560 = vunpack.c.h.b16 %v1413
    %v1561 = vunpack.c.l.b16 %v1414
    %v1562 = vunpack.c.h.b16 %v1414
    %v1563 = vunpack.c.l.b16 %v1415
    %v1564 = vunpack.c.h.b16 %v1415
    %v1565 = vunpack.c.l.b16 %v1416
    %v1566 = vunpack.c.h.b16 %v1416
    %v1567 = vunpack.c.l.b16 %v1417
    %v1568 = vunpack.c.h.b16 %v1417
    %v1569 = vunpack.c.l.b16 %v1418
    %v1570 = vunpack.c.h.b16 %v1418
    %v1571 = vunpack.c.l.b16 %v1419
    %v1572 = vunpack.c.h.b16 %v1419
    %v1573 = vunpack.c.l.b16 %v1420
    %v1574 = vunpack.c.h.b16 %v1420
    %v1575 = vunpack.c.l.b16 %v1421
    %v1576 = vunpack.c.h.b16 %v1421
    %v1577 = vunpack.c.l.b16 %v1422
    %v1578 = vunpack.c.h.b16 %v1422
    %v1579 = vunpack.c.l.b16 %v1423
    %v1580 = vunpack.c.h.b16 %v1423
    %v1581 = vunpack.c.l.b16 %v1424
    %v1582 = vunpack.c.h.b16 %v1424
    %v1583 = vunpack.c.l.b16 %v1425
    %v1584 = vunpack.c.h.b16 %v1425
    %v1585 = vunpack.c.l.b16 %v1426
    %v1586 = vunpack.c.h.b16 %v1426
    %v1587 = vunpack.c.l.b16 %v1427
    %v1588 = vunpack.c.h.b16 %v1427
    %v1589 = vunpack.c.l.b16 %v1428
    %v1590 = vunpack.c.h.b16 %v1428
    %v1591 = vunpack.c.l.b16 %v1429
    %v1592 = vunpack.c.h.b16 %v1429
    %v1593 = vunpack.c.l.b16 %v1430
    %v1594 = vunpack.c.h.b16 %v1430
    %v1595 = vunpack.c.l.b16 %v1431
    %v1596 = vunpack.c.h.b16 %v1431
    %v1597 = vunpack.c.l.b16 %v1432
    %v1598 = vunpack.c.h.b16 %v1432
    %v1599 = vunpack.c.l.b16 %v1433
    %v1600 = vunpack.c.h.b16 %v1433
    %v1601 = vunpack.c.l.b16 %v1434
    %v1602 = vunpack.c.h.b16 %v1434
    %v1603 = vunpack.c.l.b16 %v1435
    %v1604 = vunpack.c.h.b16 %v1435
    %v1605 = vunpack.c.l.b16 %v1436
    %v1606 = vunpack.c.h.b16 %v1436
    %v1607 = vunpack.c.l.b16 %v1437
    %v1608 = vunpack.c.h.b16 %v1437
    %v1609 = vunpack.c.l.b16 %v1438
    %v1610 = vunpack.c.h.b16 %v1438
    %v1611 = vunpack.c.l.b16 %v1439
    %v1612 = vunpack.c.h.b16 %v1439
    %v1613 = vunpack.c.l.b16 %v1440
    %v1614 = vunpack.c.h.b16 %v1440
    %v1615 = vunpack.c.l.b16 %v1441
    %v1616 = vunpack.c.h.b16 %v1441
    %v1617 = vunpack.c.l.b16 %v1442
    %v1618 = vunpack.c.h.b16 %v1442
    %v1619 = vunpack.c.l.b16 %v1443
    %v1620 = vunpack.c.h.b16 %v1443
    %v1621 = vunpack.c.l.b16 %v1444
    %v1622 = vunpack.c.h.b16 %v1444
    %v1623 = vunpack.c.l.b16 %v1445
    %v1624 = vunpack.c.h.b16 %v1445
    %v1625 = vunpack.c.l.b16 %v1446
    %v1626 = vunpack.c.h.b16 %v1446
    %v1627 = vunpack.c.l.b16 %v1447
    %v1628 = vunpack.c.h.b16 %v1447
    %v1629 = vunpack.c.l.b16 %v1448
    %v1630 = vunpack.c.h.b16 %v1448
    %v1631 = vunpack.c.l.b16 %v1449
    %v1632 = vunpack.c.h.b16 %v1449
    %v1633 = vunpack.c.l.b16 %v1450
    %v1634 = vunpack.c.h.b16 %v1450
    %v1635 = vunpack.c.l.b16 %v1451
    %v1636 = vunpack.c.h.b16 %v1451
    %v1637 = vunpack.c.l.b16 %v1452
    %v1638 = vunpack.c.h.b16 %v1452
    %v1639 = vunpack.c.l.b16 %v1453
    %v1640 = vunpack.c.h.b16 %v1453
    %v1641 = vunpack.c.l.b16 %v1454
    %v1642 = vunpack.c.h.b16 %v1454
    %v1643 = vunpack.c.l.b16 %v1455
    %v1644 = vunpack.c.h.b16 %v1455
    %v1645 = vunpack.c.l.b16 %v1456
    %v1646 = vunpack.c.h.b16 %v1456
    %v1647 = vunpack.c.l.b16 %v1457
    %v1648 = vunpack.c.h.b16 %v1457
    %v1649 = vunpack.c.l.b16 %v1458
    %v1650 = vunpack.c.h.b16 %v1458
    %v1651 = vunpack.c.l.b16 %v1459
    %v1652 = vunpack.c.h.b16 %v1459
    %v1653 = vunpack.c.l.b16 %v1460
    %v1654 = vunpack.c.h.b16 %v1460
    %v1655 = vunpack.c.l.b16 %v1461
    %v1656 = vunpack.c.h.b16 %v1461
    %v1657 = vunpack.c.l.b16 %v1462
    %v1658 = vunpack.c.h.b16 %v1462
    %v1659 = vunpack.c.l.b16 %v1463
    %v1660 = vunpack.c.h.b16 %v1463
    %v1661 = vunpack.c.l.b16 %v1464
    %v1662 = vunpack.c.h.b16 %v1464
    %v1663 = vunpack.c.l.b16 %v1465
    %v1664 = vunpack.c.h.b16 %v1465
    %v1665 = vunpack.c.l.b16 %v1466
    %v1666 = vunpack.c.h.b16 %v1466
    %v1667 = vunpack.c.l.b16 %v1467
    %v1668 = vunpack.c.h.b16 %v1467
    %v1669 = vunpack.c.l.b16 %v1468
    %v1670 = vunpack.c.h.b16 %v1468
    %v1671 = vunpack.c.l.b16 %v1469
    %v1672 = vunpack.c.h.b16 %v1469
    %v1673 = vunpack.c.l.b16 %v1470
    %v1674 = vunpack.c.h.b16 %v1470
    %v1675 = vpack.c.b16 %v1549, %v1547
    %v1676 = vpack.c.b16 %v1550, %v1548
    %v1677 = vpack.c.b16 %v1553, %v1551
    %v1678 = vpack.c.b16 %v1554, %v1552
    %v1679 = vpack.c.b16 %v1557, %v1555
    %v1680 = vpack.c.b16 %v1558, %v1556
    %v1681 = vpack.c.b16 %v1561, %v1559
    %v1682 = vpack.c.b16 %v1562, %v1560
    %v1683 = vpack.c.b16 %v1565, %v1563
    %v1684 = vpack.c.b16 %v1566, %v1564
    %v1685 = vpack.c.b16 %v1569, %v1567
    %v1686 = vpack.c.b16 %v1570, %v1568
    %v1687 = vpack.c.b16 %v1573, %v1571
    %v1688 = vpack.c.b16 %v1574, %v1572
    %v1689 = vpack.c.b16 %v1577, %v1575
    %v1690 = vpack.c.b16 %v1578, %v1576
    %v1691 = vpack.c.b16 %v1581, %v1579
    %v1692 = vpack.c.b16 %v1582, %v1580
    %v1693 = vpack.c.b16 %v1585, %v1583
    %v1694 = vpack.c.b16 %v1586, %v1584
    %v1695 = vpack.c.b16 %v1589, %v1587
    %v1696 = vpack.c.b16 %v1590, %v1588
    %v1697 = vpack.c.b16 %v1593, %v1591
    %v1698 = vpack.c.b16 %v1594, %v1592
    %v1699 = vpack.c.b16 %v1597, %v1595
    %v1700 = vpack.c.b16 %v1598, %v1596
    %v1701 = vpack.c.b16 %v1601, %v1599
    %v1702 = vpack.c.b16 %v1602, %v1600
    %v1703 = vpack.c.b16 %v1605, %v1603
    %v1704 = vpack.c.b16 %v1606, %v1604
    %v1705 = vpack.c.b16 %v1609, %v1607
    %v1706 = vpack.c.b16 %v1610, %v1608
    %v1707 = vpack.c.b16 %v1613, %v1611
    %v1708 = vpack.c.b16 %v1614, %v1612
    %v1709 = vpack.c.b16 %v1617, %v1615
    %v1710 = vpack.c.b16 %v1618, %v1616
    %v1711 = vpack.c.b16 %v1621, %v1619
    %v1712 = vpack.c.b16 %v1622, %v1620
    %v1713 = vpack.c.b16 %v1625, %v1623
    %v1714 = vpack.c.b16 %v1626, %v1624
    %v1715 = vpack.c.b16 %v1629, %v1627
    %v1716 = vpack.c.b16 %v1630, %v1628
    %v1717 = vpack.c.b16 %v1633, %v1631
    %v1718 = vpack.c.b16 %v1634, %v1632
    %v1719 = vpack.c.b16 %v1637, %v1635
    %v1720 = vpack.c.b16 %v1638, %v1636
    %v1721 = vpack.c.b16 %v1641, %v1639
    %v1722 = vpack.c.b16 %v1642, %v1640
    %v1723 = vpack.c.b16 %v1645, %v1643
    %v1724 = vpack.c.b16 %v1646, %v1644
    %v1725 = vpack.c.b16 %v1649, %v1647
    %v1726 = vpack.c.b16 %v1650, %v1648
    %v1727 = vpack.c.b16 %v1653, %v1651
    %v1728 = vpack.c.b16 %v1654, %v1652
    %v1729 = vpack.c.b16 %v1657, %v1655
    %v1730 = vpack.c.b16 %v1658, %v1656
    %v1731 = vpack.c.b16 %v1661, %v1659
    %v1732 = vpack.c.b16 %v1662, %v1660
    %v1733 = vpack.c.b16 %v1665, %v1663
    %v1734 = vpack.c.b16 %v1666, %v1664
    %v1735 = vpack.c.b16 %v1669, %v1667
    %v1736 = vpack.c.b16 %v1670, %v1668
    %v1737 = vpack.c.b16 %v1673, %v1671
    %v1738 = vpack.c.b16 %v1674, %v1672
    %1803 = vmatprep.subr.bf16.mxu0 %v1676
    %1804 = vmatpush1.bf16.msra.mxu0 %v1675
    %1805 = vmatprep.subr.bf16.mxu0 %v1678
    %1806 = vmatpush1.bf16.msra.mxu0 %v1677
    %1807 = vmatprep.subr.bf16.mxu0 %v1680
    %1808 = vmatpush1.bf16.msra.mxu0 %v1679
    %1809 = vmatprep.subr.bf16.mxu0 %v1682
    %1810 = vmatpush1.bf16.msra.mxu0 %v1681
    %1811 = vmatprep.subr.bf16.mxu0 %v1684
    %1812 = vmatpush1.bf16.msra.mxu0 %v1683
    %1813 = vmatprep.subr.bf16.mxu0 %v1686
    %1814 = vmatpush1.bf16.msra.mxu0 %v1685
    %1815 = vmatprep.subr.bf16.mxu0 %v1688
    %1816 = vmatpush1.bf16.msra.mxu0 %v1687
    %1817 = vmatprep.subr.bf16.mxu0 %v1690
    %1818 = vmatpush1.bf16.msra.mxu0 %v1689
    %1819 = vmatprep.subr.bf16.mxu0 %v1692
    %1820 = vmatpush1.bf16.msra.mxu0 %v1691
    %1821 = vmatprep.subr.bf16.mxu0 %v1694
    %1822 = vmatpush1.bf16.msra.mxu0 %v1693
    %1823 = vmatprep.subr.bf16.mxu0 %v1696
    %1824 = vmatpush1.bf16.msra.mxu0 %v1695
    %1825 = vmatprep.subr.bf16.mxu0 %v1698
    %1826 = vmatpush1.bf16.msra.mxu0 %v1697
    %1827 = vmatprep.subr.bf16.mxu0 %v1700
    %1828 = vmatpush1.bf16.msra.mxu0 %v1699
    %1829 = vmatprep.subr.bf16.mxu0 %v1702
    %1830 = vmatpush1.bf16.msra.mxu0 %v1701
    %1831 = vmatprep.subr.bf16.mxu0 %v1704
    %1832 = vmatpush1.bf16.msra.mxu0 %v1703
    %1833 = vmatprep.subr.bf16.mxu0 %v1706
    %1834 = vmatpush1.bf16.msra.mxu0 %v1705
    %1835 = vmatprep.mubr.bf16.mxu0 %v1404
    %1836 = vmatmul.mubr.bf16.gmra.mrb[0].mxu0 %v1403
    %v1837 = vpop.f32.mrb[0].mxu0
    %v1838 = vadd.f32 %v1476, %v1837
    %v1839 = vpop.f32.mrb[0].mxu0
    %v1840 = vadd.f32 %v1480, %v1839
    %v1841 = vpop.f32.mrb[0].mxu0
    %v1842 = vadd.f32 %v1476, %v1841
    %v1843 = vpop.f32.mrb[0].mxu0
    %v1844 = vadd.f32 %v1480, %v1843
    %1845 = vdwg.mxu0
    %1846 = vmatprep.subr.bf16.mxu0 %v1708
    %1847 = vmatpush1.bf16.msra.mxu0 %v1707
    %1848 = vmatprep.subr.bf16.mxu0 %v1710
    %1849 = vmatpush1.bf16.msra.mxu0 %v1709
    %1850 = vmatprep.subr.bf16.mxu0 %v1712
    %1851 = vmatpush1.bf16.msra.mxu0 %v1711
    %1852 = vmatprep.subr.bf16.mxu0 %v1714
    %1853 = vmatpush1.bf16.msra.mxu0 %v1713
    %1854 = vmatprep.subr.bf16.mxu0 %v1716
    %1855 = vmatpush1.bf16.msra.mxu0 %v1715
    %1856 = vmatprep.subr.bf16.mxu0 %v1718
    %1857 = vmatpush1.bf16.msra.mxu0 %v1717
    %1858 = vmatprep.subr.bf16.mxu0 %v1720
    %1859 = vmatpush1.bf16.msra.mxu0 %v1719
    %1860 = vmatprep.subr.bf16.mxu0 %v1722
    %1861 = vmatpush1.bf16.msra.mxu0 %v1721
    %1862 = vmatprep.subr.bf16.mxu0 %v1724
    %1863 = vmatpush1.bf16.msra.mxu0 %v1723
    %1864 = vmatprep.subr.bf16.mxu0 %v1726
    %1865 = vmatpush1.bf16.msra.mxu0 %v1725
    %1866 = vmatprep.subr.bf16.mxu0 %v1728
    %1867 = vmatpush1.bf16.msra.mxu0 %v1727
    %1868 = vmatprep.subr.bf16.mxu0 %v1730
    %1869 = vmatpush1.bf16.msra.mxu0 %v1729
    %1870 = vmatprep.subr.bf16.mxu0 %v1732
    %1871 = vmatpush1.bf16.msra.mxu0 %v1731
    %1872 = vmatprep.subr.bf16.mxu0 %v1734
    %1873 = vmatpush1.bf16.msra.mxu0 %v1733
    %1874 = vmatprep.subr.bf16.mxu0 %v1736
    %1875 = vmatpush1.bf16.msra.mxu0 %v1735
    %1876 = vmatprep.subr.bf16.mxu0 %v1738
    %1877 = vmatpush1.bf16.msra.mxu0 %v1737
    %1878 = vmatprep.mubr.bf16.mxu0 %v1406
    %1879 = vmatmul.mubr.bf16.gmra.mrb[0].mxu0 %v1405
    %v1880 = vpop.f32.mrb[0].mxu0
    %v1881 = vadd.f32 %v1838, %v1880
    %v1882 = vpop.f32.mrb[0].mxu0
    %v1883 = vadd.f32 %v1840, %v1882
    %v1884 = vpop.f32.mrb[0].mxu0
    %v1885 = vadd.f32 %v1842, %v1884
    %v1886 = vpop.f32.mrb[0].mxu0
    %v1887 = vadd.f32 %v1844, %v1886
    %1888 = vdwg.mxu0
    %v1889 = vtanh.pop %v1881
    %v1890 = vtanh.pop %v1883
    %v1891 = vtanh.pop %v1885
    %v1892 = vtanh.pop %v1887
    %v1893 = vld [vmem:[%s9] sm:$0x3]
    %v1895 = vlaneseq
    %v1896 = vshrl.u32 %v1895, 7
    %v1897 = vsub.s32 0, %v1896
    %v1898 = vrot.slane %v1893, %v1897
    %v1899 = vlaneseq
    %v1900 = vshrl.u32 %v1899, 7
    %v1901 = vsub.s32 1, %v1900
    %v1902 = vrot.slane %v1893, %v1901
    %v1905 = vmul.f32 %v1889, %v1898
    %v1906 = vmul.f32 %v1890, %v1902
    %v1907 = vld [vmem:[%s10] sm:$0x3]
    %v1909 = vlaneseq
    %v1910 = vshrl.u32 %v1909, 7
    %v1911 = vsub.s32 0, %v1910
    %v1912 = vrot.slane %v1907, %v1911
    %v1913 = vlaneseq
    %v1914 = vshrl.u32 %v1913, 7
    %v1915 = vsub.s32 1, %v1914
    %v1916 = vrot.slane %v1907, %v1915
    %v1919 = vadd.f32 %v1905, %v1912
    %v1920 = vadd.f32 %v1906, %v1916
    %v1921 = vld [vmem:[%s11] sm:$0x3]
    %v1923 = vlaneseq
    %v1924 = vshrl.u32 %v1923, 7
    %v1925 = vsub.s32 0, %v1924
    %v1926 = vrot.slane %v1921, %v1925
    %v1927 = vlaneseq
    %v1928 = vshrl.u32 %v1927, 7
    %v1929 = vsub.s32 1, %v1928
    %v1930 = vrot.slane %v1921, %v1929
    %v1933 = vmul.f32 %v1891, %v1926
    %v1934 = vmul.f32 %v1892, %v1930
    %v1935 = vld [vmem:[%s12] sm:$0x3]
    %v1937 = vlaneseq
    %v1938 = vshrl.u32 %v1937, 7
    %v1939 = vsub.s32 0, %v1938
    %v1940 = vrot.slane %v1935, %v1939
    %v1941 = vlaneseq
    %v1942 = vshrl.u32 %v1941, 7
    %v1943 = vsub.s32 1, %v1942
    %v1944 = vrot.slane %v1935, %v1943
    %v1947 = vadd.f32 %v1933, %v1940
    %v1948 = vadd.f32 %v1934, %v1944
    %v1949 = vpack.c.bf16 %v1919, %v1919
    %v1950 = vpack.c.bf16 %v1920, %v1920
    %v1951 = vld [vmem:[#allocation7] sm:$0xff]
    %v1952 = vld [vmem:[#allocation7 + $0x8] sm:$0xff]
    %v1953 = vld [vmem:[#allocation7 + $0x10] sm:$0xff]
    %v1954 = vld [vmem:[#allocation7 + $0x18] sm:$0xff]
    %v1955 = vld [vmem:[#allocation7 + $0x20] sm:$0xff]
    %v1956 = vld [vmem:[#allocation7 + $0x28] sm:$0xff]
    %v1957 = vld [vmem:[#allocation7 + $0x30] sm:$0xff]
    %v1958 = vld [vmem:[#allocation7 + $0x38] sm:$0xff]
    %v1959 = vld [vmem:[#allocation7 + $0x40] sm:$0xff]
    %v1960 = vld [vmem:[#allocation7 + $0x48] sm:$0xff]
    %v1961 = vld [vmem:[#allocation7 + $0x50] sm:$0xff]
    %v1962 = vld [vmem:[#allocation7 + $0x58] sm:$0xff]
    %v1963 = vld [vmem:[#allocation7 + $0x60] sm:$0xff]
    %v1964 = vld [vmem:[#allocation7 + $0x68] sm:$0xff]
    %v1965 = vld [vmem:[#allocation7 + $0x70] sm:$0xff]
    %v1966 = vld [vmem:[#allocation7 + $0x78] sm:$0xff]
    %v1967 = vld [vmem:[#allocation7 + $0x80] sm:$0xff]
    %v1968 = vld [vmem:[#allocation7 + $0x88] sm:$0xff]
    %v1969 = vld [vmem:[#allocation7 + $0x90] sm:$0xff]
    %v1970 = vld [vmem:[#allocation7 + $0x98] sm:$0xff]
    %v1971 = vld [vmem:[#allocation7 + $0xa0] sm:$0xff]
    %v1972 = vld [vmem:[#allocation7 + $0xa8] sm:$0xff]
    %v1973 = vld [vmem:[#allocation7 + $0xb0] sm:$0xff]
    %v1974 = vld [vmem:[#allocation7 + $0xb8] sm:$0xff]
    %v1975 = vld [vmem:[#allocation7 + $0xc0] sm:$0xff]
    %v1976 = vld [vmem:[#allocation7 + $0xc8] sm:$0xff]
    %v1977 = vld [vmem:[#allocation7 + $0xd0] sm:$0xff]
    %v1978 = vld [vmem:[#allocation7 + $0xd8] sm:$0xff]
    %v1979 = vld [vmem:[#allocation7 + $0xe0] sm:$0xff]
    %v1980 = vld [vmem:[#allocation7 + $0xe8] sm:$0xff]
    %v1981 = vld [vmem:[#allocation7 + $0xf0] sm:$0xff]
    %v1982 = vld [vmem:[#allocation7 + $0xf8] sm:$0xff]
    %v1983 = vpack.c.bf16 %v1947, %v1947
    %v1984 = vpack.c.bf16 %v1948, %v1948
    %v1985 = vld [vmem:[#allocation9] sm:$0xff]
    %v1986 = vld [vmem:[#allocation9 + $0x8] sm:$0xff]
    %v1987 = vld [vmem:[#allocation9 + $0x10] sm:$0xff]
    %v1988 = vld [vmem:[#allocation9 + $0x18] sm:$0xff]
    %v1989 = vld [vmem:[#allocation9 + $0x20] sm:$0xff]
    %v1990 = vld [vmem:[#allocation9 + $0x28] sm:$0xff]
    %v1991 = vld [vmem:[#allocation9 + $0x30] sm:$0xff]
    %v1992 = vld [vmem:[#allocation9 + $0x38] sm:$0xff]
    %v1993 = vld [vmem:[#allocation9 + $0x40] sm:$0xff]
    %v1994 = vld [vmem:[#allocation9 + $0x48] sm:$0xff]
    %v1995 = vld [vmem:[#allocation9 + $0x50] sm:$0xff]
    %v1996 = vld [vmem:[#allocation9 + $0x58] sm:$0xff]
    %v1997 = vld [vmem:[#allocation9 + $0x60] sm:$0xff]
    %v1998 = vld [vmem:[#allocation9 + $0x68] sm:$0xff]
    %v1999 = vld [vmem:[#allocation9 + $0x70] sm:$0xff]
    %v2000 = vld [vmem:[#allocation9 + $0x78] sm:$0xff]
    %v2001 = vld [vmem:[#allocation9 + $0x80] sm:$0xff]
    %v2002 = vld [vmem:[#allocation9 + $0x88] sm:$0xff]
    %v2003 = vld [vmem:[#allocation9 + $0x90] sm:$0xff]
    %v2004 = vld [vmem:[#allocation9 + $0x98] sm:$0xff]
    %v2005 = vld [vmem:[#allocation9 + $0xa0] sm:$0xff]
    %v2006 = vld [vmem:[#allocation9 + $0xa8] sm:$0xff]
    %v2007 = vld [vmem:[#allocation9 + $0xb0] sm:$0xff]
    %v2008 = vld [vmem:[#allocation9 + $0xb8] sm:$0xff]
    %v2009 = vld [vmem:[#allocation9 + $0xc0] sm:$0xff]
    %v2010 = vld [vmem:[#allocation9 + $0xc8] sm:$0xff]
    %v2011 = vld [vmem:[#allocation9 + $0xd0] sm:$0xff]
    %v2012 = vld [vmem:[#allocation9 + $0xd8] sm:$0xff]
    %v2013 = vld [vmem:[#allocation9 + $0xe0] sm:$0xff]
    %v2014 = vld [vmem:[#allocation9 + $0xe8] sm:$0xff]
    %v2015 = vld [vmem:[#allocation9 + $0xf0] sm:$0xff]
    %v2016 = vld [vmem:[#allocation9 + $0xf8] sm:$0xff]
    %v2049 = vunpack.c.l.b16 %v1985
    %v2050 = vunpack.c.h.b16 %v1985
    %v2051 = vunpack.c.l.b16 %v1986
    %v2052 = vunpack.c.h.b16 %v1986
    %v2053 = vunpack.c.l.b16 %v1987
    %v2054 = vunpack.c.h.b16 %v1987
    %v2055 = vunpack.c.l.b16 %v1988
    %v2056 = vunpack.c.h.b16 %v1988
    %v2057 = vunpack.c.l.b16 %v1989
    %v2058 = vunpack.c.h.b16 %v1989
    %v2059 = vunpack.c.l.b16 %v1990
    %v2060 = vunpack.c.h.b16 %v1990
    %v2061 = vunpack.c.l.b16 %v1991
    %v2062 = vunpack.c.h.b16 %v1991
    %v2063 = vunpack.c.l.b16 %v1992
    %v2064 = vunpack.c.h.b16 %v1992
    %v2065 = vunpack.c.l.b16 %v1993
    %v2066 = vunpack.c.h.b16 %v1993
    %v2067 = vunpack.c.l.b16 %v1994
    %v2068 = vunpack.c.h.b16 %v1994
    %v2069 = vunpack.c.l.b16 %v1995
    %v2070 = vunpack.c.h.b16 %v1995
    %v2071 = vunpack.c.l.b16 %v1996
    %v2072 = vunpack.c.h.b16 %v1996
    %v2073 = vunpack.c.l.b16 %v1997
    %v2074 = vunpack.c.h.b16 %v1997
    %v2075 = vunpack.c.l.b16 %v1998
    %v2076 = vunpack.c.h.b16 %v1998
    %v2077 = vunpack.c.l.b16 %v1999
    %v2078 = vunpack.c.h.b16 %v1999
    %v2079 = vunpack.c.l.b16 %v2000
    %v2080 = vunpack.c.h.b16 %v2000
    %v2081 = vunpack.c.l.b16 %v2001
    %v2082 = vunpack.c.h.b16 %v2001
    %v2083 = vunpack.c.l.b16 %v2002
    %v2084 = vunpack.c.h.b16 %v2002
    %v2085 = vunpack.c.l.b16 %v2003
    %v2086 = vunpack.c.h.b16 %v2003
    %v2087 = vunpack.c.l.b16 %v2004
    %v2088 = vunpack.c.h.b16 %v2004
    %v2089 = vunpack.c.l.b16 %v2005
    %v2090 = vunpack.c.h.b16 %v2005
    %v2091 = vunpack.c.l.b16 %v2006
    %v2092 = vunpack.c.h.b16 %v2006
    %v2093 = vunpack.c.l.b16 %v2007
    %v2094 = vunpack.c.h.b16 %v2007
    %v2095 = vunpack.c.l.b16 %v2008
    %v2096 = vunpack.c.h.b16 %v2008
    %v2097 = vunpack.c.l.b16 %v2009
    %v2098 = vunpack.c.h.b16 %v2009
    %v2099 = vunpack.c.l.b16 %v2010
    %v2100 = vunpack.c.h.b16 %v2010
    %v2101 = vunpack.c.l.b16 %v2011
    %v2102 = vunpack.c.h.b16 %v2011
    %v2103 = vunpack.c.l.b16 %v2012
    %v2104 = vunpack.c.h.b16 %v2012
    %v2105 = vunpack.c.l.b16 %v2013
    %v2106 = vunpack.c.h.b16 %v2013
    %v2107 = vunpack.c.l.b16 %v2014
    %v2108 = vunpack.c.h.b16 %v2014
    %v2109 = vunpack.c.l.b16 %v2015
    %v2110 = vunpack.c.h.b16 %v2015
    %v2111 = vunpack.c.l.b16 %v2016
    %v2112 = vunpack.c.h.b16 %v2016
    %v2113 = vpack.c.b16 %v2051, %v2049
    %v2114 = vpack.c.b16 %v2052, %v2050
    %v2115 = vpack.c.b16 %v2055, %v2053
    %v2116 = vpack.c.b16 %v2056, %v2054
    %v2117 = vpack.c.b16 %v2059, %v2057
    %v2118 = vpack.c.b16 %v2060, %v2058
    %v2119 = vpack.c.b16 %v2063, %v2061
    %v2120 = vpack.c.b16 %v2064, %v2062
    %v2121 = vpack.c.b16 %v2067, %v2065
    %v2122 = vpack.c.b16 %v2068, %v2066
    %v2123 = vpack.c.b16 %v2071, %v2069
    %v2124 = vpack.c.b16 %v2072, %v2070
    %v2125 = vpack.c.b16 %v2075, %v2073
    %v2126 = vpack.c.b16 %v2076, %v2074
    %v2127 = vpack.c.b16 %v2079, %v2077
    %v2128 = vpack.c.b16 %v2080, %v2078
    %v2129 = vpack.c.b16 %v2083, %v2081
    %v2130 = vpack.c.b16 %v2084, %v2082
    %v2131 = vpack.c.b16 %v2087, %v2085
    %v2132 = vpack.c.b16 %v2088, %v2086
    %v2133 = vpack.c.b16 %v2091, %v2089
    %v2134 = vpack.c.b16 %v2092, %v2090
    %v2135 = vpack.c.b16 %v2095, %v2093
    %v2136 = vpack.c.b16 %v2096, %v2094
    %v2137 = vpack.c.b16 %v2099, %v2097
    %v2138 = vpack.c.b16 %v2100, %v2098
    %v2139 = vpack.c.b16 %v2103, %v2101
    %v2140 = vpack.c.b16 %v2104, %v2102
    %v2141 = vpack.c.b16 %v2107, %v2105
    %v2142 = vpack.c.b16 %v2108, %v2106
    %v2143 = vpack.c.b16 %v2111, %v2109
    %v2144 = vpack.c.b16 %v2112, %v2110
    %2177 = vmatprep.subr.bf16.mxu0 %v2114
    %2178 = vmatpush1.bf16.msra.mxu0 %v2113
    %2179 = vmatprep.subr.bf16.mxu0 %v2116
    %2180 = vmatpush1.bf16.msra.mxu0 %v2115
    %2181 = vmatprep.subr.bf16.mxu0 %v2118
    %2182 = vmatpush1.bf16.msra.mxu0 %v2117
    %2183 = vmatprep.subr.bf16.mxu0 %v2120
    %2184 = vmatpush1.bf16.msra.mxu0 %v2119
    %2185 = vmatprep.subr.bf16.mxu0 %v2122
    %2186 = vmatpush1.bf16.msra.mxu0 %v2121
    %2187 = vmatprep.subr.bf16.mxu0 %v2124
    %2188 = vmatpush1.bf16.msra.mxu0 %v2123
    %2189 = vmatprep.subr.bf16.mxu0 %v2126
    %2190 = vmatpush1.bf16.msra.mxu0 %v2125
    %2191 = vmatprep.subr.bf16.mxu0 %v2128
    %2192 = vmatpush1.bf16.msra.mxu0 %v2127
    %2193 = vmatprep.subr.bf16.mxu0 %v2130
    %2194 = vmatpush1.bf16.msra.mxu0 %v2129
    %2195 = vmatprep.subr.bf16.mxu0 %v2132
    %2196 = vmatpush1.bf16.msra.mxu0 %v2131
    %2197 = vmatprep.subr.bf16.mxu0 %v2134
    %2198 = vmatpush1.bf16.msra.mxu0 %v2133
    %2199 = vmatprep.subr.bf16.mxu0 %v2136
    %2200 = vmatpush1.bf16.msra.mxu0 %v2135
    %2201 = vmatprep.subr.bf16.mxu0 %v2138
    %2202 = vmatpush1.bf16.msra.mxu0 %v2137
    %2203 = vmatprep.subr.bf16.mxu0 %v2140
    %2204 = vmatpush1.bf16.msra.mxu0 %v2139
    %2205 = vmatprep.subr.bf16.mxu0 %v2142
    %2206 = vmatpush1.bf16.msra.mxu0 %v2141
    %2207 = vmatprep.subr.bf16.mxu0 %v2144
    %2208 = vmatpush1.bf16.msra.mxu0 %v2143
    %2209 = vmatprep.mubr.bf16.mxu0 %v1984
    %2210 = vmatmul.mubr.bf16.gmra.mrb[0].mxu0 %v1983
    %v2211 = vpop.f32.mrb[0].mxu0
    %v2212 = vadd.f32 0.0, %v2211
    %v2213 = vpop.f32.mrb[0].mxu0
    %v2214 = vadd.f32 0.0, %v2213
    %v2215 = vpop.f32.mrb[0].mxu0
    %v2216 = vpop.f32.mrb[0].mxu0
    %2217 = vdwg.mxu0
    %v2250 = vunpack.c.l.b16 %v1951
    %v2251 = vunpack.c.h.b16 %v1951
    %v2252 = vunpack.c.l.b16 %v1952
    %v2253 = vunpack.c.h.b16 %v1952
    %v2254 = vunpack.c.l.b16 %v1953
    %v2255 = vunpack.c.h.b16 %v1953
    %v2256 = vunpack.c.l.b16 %v1954
    %v2257 = vunpack.c.h.b16 %v1954
    %v2258 = vunpack.c.l.b16 %v1955
    %v2259 = vunpack.c.h.b16 %v1955
    %v2260 = vunpack.c.l.b16 %v1956
    %v2261 = vunpack.c.h.b16 %v1956
    %v2262 = vunpack.c.l.b16 %v1957
    %v2263 = vunpack.c.h.b16 %v1957
    %v2264 = vunpack.c.l.b16 %v1958
    %v2265 = vunpack.c.h.b16 %v1958
    %v2266 = vunpack.c.l.b16 %v1959
    %v2267 = vunpack.c.h.b16 %v1959
    %v2268 = vunpack.c.l.b16 %v1960
    %v2269 = vunpack.c.h.b16 %v1960
    %v2270 = vunpack.c.l.b16 %v1961
    %v2271 = vunpack.c.h.b16 %v1961
    %v2272 = vunpack.c.l.b16 %v1962
    %v2273 = vunpack.c.h.b16 %v1962
    %v2274 = vunpack.c.l.b16 %v1963
    %v2275 = vunpack.c.h.b16 %v1963
    %v2276 = vunpack.c.l.b16 %v1964
    %v2277 = vunpack.c.h.b16 %v1964
    %v2278 = vunpack.c.l.b16 %v1965
    %v2279 = vunpack.c.h.b16 %v1965
    %v2280 = vunpack.c.l.b16 %v1966
    %v2281 = vunpack.c.h.b16 %v1966
    %v2282 = vunpack.c.l.b16 %v1967
    %v2283 = vunpack.c.h.b16 %v1967
    %v2284 = vunpack.c.l.b16 %v1968
    %v2285 = vunpack.c.h.b16 %v1968
    %v2286 = vunpack.c.l.b16 %v1969
    %v2287 = vunpack.c.h.b16 %v1969
    %v2288 = vunpack.c.l.b16 %v1970
    %v2289 = vunpack.c.h.b16 %v1970
    %v2290 = vunpack.c.l.b16 %v1971
    %v2291 = vunpack.c.h.b16 %v1971
    %v2292 = vunpack.c.l.b16 %v1972
    %v2293 = vunpack.c.h.b16 %v1972
    %v2294 = vunpack.c.l.b16 %v1973
    %v2295 = vunpack.c.h.b16 %v1973
    %v2296 = vunpack.c.l.b16 %v1974
    %v2297 = vunpack.c.h.b16 %v1974
    %v2298 = vunpack.c.l.b16 %v1975
    %v2299 = vunpack.c.h.b16 %v1975
    %v2300 = vunpack.c.l.b16 %v1976
    %v2301 = vunpack.c.h.b16 %v1976
    %v2302 = vunpack.c.l.b16 %v1977
    %v2303 = vunpack.c.h.b16 %v1977
    %v2304 = vunpack.c.l.b16 %v1978
    %v2305 = vunpack.c.h.b16 %v1978
    %v2306 = vunpack.c.l.b16 %v1979
    %v2307 = vunpack.c.h.b16 %v1979
    %v2308 = vunpack.c.l.b16 %v1980
    %v2309 = vunpack.c.h.b16 %v1980
    %v2310 = vunpack.c.l.b16 %v1981
    %v2311 = vunpack.c.h.b16 %v1981
    %v2312 = vunpack.c.l.b16 %v1982
    %v2313 = vunpack.c.h.b16 %v1982
    %v2314 = vpack.c.b16 %v2252, %v2250
    %v2315 = vpack.c.b16 %v2253, %v2251
    %v2316 = vpack.c.b16 %v2256, %v2254
    %v2317 = vpack.c.b16 %v2257, %v2255
    %v2318 = vpack.c.b16 %v2260, %v2258
    %v2319 = vpack.c.b16 %v2261, %v2259
    %v2320 = vpack.c.b16 %v2264, %v2262
    %v2321 = vpack.c.b16 %v2265, %v2263
    %v2322 = vpack.c.b16 %v2268, %v2266
    %v2323 = vpack.c.b16 %v2269, %v2267
    %v2324 = vpack.c.b16 %v2272, %v2270
    %v2325 = vpack.c.b16 %v2273, %v2271
    %v2326 = vpack.c.b16 %v2276, %v2274
    %v2327 = vpack.c.b16 %v2277, %v2275
    %v2328 = vpack.c.b16 %v2280, %v2278
    %v2329 = vpack.c.b16 %v2281, %v2279
    %v2330 = vpack.c.b16 %v2284, %v2282
    %v2331 = vpack.c.b16 %v2285, %v2283
    %v2332 = vpack.c.b16 %v2288, %v2286
    %v2333 = vpack.c.b16 %v2289, %v2287
    %v2334 = vpack.c.b16 %v2292, %v2290
    %v2335 = vpack.c.b16 %v2293, %v2291
    %v2336 = vpack.c.b16 %v2296, %v2294
    %v2337 = vpack.c.b16 %v2297, %v2295
    %v2338 = vpack.c.b16 %v2300, %v2298
    %v2339 = vpack.c.b16 %v2301, %v2299
    %v2340 = vpack.c.b16 %v2304, %v2302
    %v2341 = vpack.c.b16 %v2305, %v2303
    %v2342 = vpack.c.b16 %v2308, %v2306
    %v2343 = vpack.c.b16 %v2309, %v2307
    %v2344 = vpack.c.b16 %v2312, %v2310
    %v2345 = vpack.c.b16 %v2313, %v2311
    %2378 = vmatprep.subr.bf16.mxu0 %v2315
    %2379 = vmatpush1.bf16.msra.mxu0 %v2314
    %2380 = vmatprep.subr.bf16.mxu0 %v2317
    %2381 = vmatpush1.bf16.msra.mxu0 %v2316
    %2382 = vmatprep.subr.bf16.mxu0 %v2319
    %2383 = vmatpush1.bf16.msra.mxu0 %v2318
    %2384 = vmatprep.subr.bf16.mxu0 %v2321
    %2385 = vmatpush1.bf16.msra.mxu0 %v2320
    %2386 = vmatprep.subr.bf16.mxu0 %v2323
    %2387 = vmatpush1.bf16.msra.mxu0 %v2322
    %2388 = vmatprep.subr.bf16.mxu0 %v2325
    %2389 = vmatpush1.bf16.msra.mxu0 %v2324
    %2390 = vmatprep.subr.bf16.mxu0 %v2327
    %2391 = vmatpush1.bf16.msra.mxu0 %v2326
    %2392 = vmatprep.subr.bf16.mxu0 %v2329
    %2393 = vmatpush1.bf16.msra.mxu0 %v2328
    %2394 = vmatprep.subr.bf16.mxu0 %v2331
    %2395 = vmatpush1.bf16.msra.mxu0 %v2330
    %2396 = vmatprep.subr.bf16.mxu0 %v2333
    %2397 = vmatpush1.bf16.msra.mxu0 %v2332
    %2398 = vmatprep.subr.bf16.mxu0 %v2335
    %2399 = vmatpush1.bf16.msra.mxu0 %v2334
    %2400 = vmatprep.subr.bf16.mxu0 %v2337
    %2401 = vmatpush1.bf16.msra.mxu0 %v2336
    %2402 = vmatprep.subr.bf16.mxu0 %v2339
    %2403 = vmatpush1.bf16.msra.mxu0 %v2338
    %2404 = vmatprep.subr.bf16.mxu0 %v2341
    %2405 = vmatpush1.bf16.msra.mxu0 %v2340
    %2406 = vmatprep.subr.bf16.mxu0 %v2343
    %2407 = vmatpush1.bf16.msra.mxu0 %v2342
    %2408 = vmatprep.subr.bf16.mxu0 %v2345
    %2409 = vmatpush1.bf16.msra.mxu0 %v2344
    %2410 = vmatprep.mubr.bf16.mxu0 %v1950
    %2411 = vmatmul.mubr.bf16.gmra.mrb[0].mxu0 %v1949
    %v2412 = vpop.f32.mrb[0].mxu0
    %v2413 = vadd.f32 %v2212, %v2412
    %v2414 = vpop.f32.mrb[0].mxu0
    %v2415 = vadd.f32 %v2214, %v2414
    %v2416 = vpop.f32.mrb[0].mxu0
    %v2417 = vpop.f32.mrb[0].mxu0
    %2418 = vdwg.mxu0
    %v2419 = vld [vmem:[%s15] sm:$0x3]
    %v2421 = vlaneseq
    %v2422 = vshrl.u32 %v2421, 7
    %v2423 = vsub.s32 0, %v2422
    %v2424 = vrot.slane %v2419, %v2423
    %v2425 = vlaneseq
    %v2426 = vshrl.u32 %v2425, 7
    %v2427 = vsub.s32 1, %v2426
    %v2428 = vrot.slane %v2419, %v2427
    %v2431 = vadd.f32 %v2413, %v2424
    %v2432 = vadd.f32 %v2415, %v2428
    %v2433 = vtanh.pop %v2431
    %v2434 = vtanh.pop %v2432
    %v2435 = vpack.c.bf16 %v2433, %v2433
    %v2436 = vpack.c.bf16 %v2434, %v2434
    %v2437 = vld [vmem:[%s16] sm:$0xf]
    %v2438 = vld [vmem:[%s16 + $0x4] sm:$0xf]
    %v2439 = vld [vmem:[%s16 + $0x8] sm:$0xf]
    %v2440 = vld [vmem:[%s16 + $0xc] sm:$0xf]
    %v2441 = vld [vmem:[%s16 + $0x10] sm:$0xf]
    %v2442 = vld [vmem:[%s16 + $0x14] sm:$0xf]
    %v2443 = vld [vmem:[%s16 + $0x18] sm:$0xf]
    %v2444 = vld [vmem:[%s16 + $0x1c] sm:$0xf]
    %v2445 = vld [vmem:[%s16 + $0x20] sm:$0xf]
    %v2446 = vld [vmem:[%s16 + $0x24] sm:$0xf]
    %v2447 = vld [vmem:[%s16 + $0x28] sm:$0xf]
    %v2448 = vld [vmem:[%s16 + $0x2c] sm:$0xf]
    %v2449 = vld [vmem:[%s16 + $0x30] sm:$0xf]
    %v2450 = vld [vmem:[%s16 + $0x34] sm:$0xf]
    %v2451 = vld [vmem:[%s16 + $0x38] sm:$0xf]
    %v2452 = vld [vmem:[%s16 + $0x3c] sm:$0xf]
    %v2453 = vld [vmem:[%s16 + $0x40] sm:$0xf]
    %v2454 = vld [vmem:[%s16 + $0x44] sm:$0xf]
    %v2455 = vld [vmem:[%s16 + $0x48] sm:$0xf]
    %v2456 = vld [vmem:[%s16 + $0x4c] sm:$0xf]
    %v2457 = vld [vmem:[%s16 + $0x50] sm:$0xf]
    %v2458 = vld [vmem:[%s16 + $0x54] sm:$0xf]
    %v2459 = vld [vmem:[%s16 + $0x58] sm:$0xf]
    %v2460 = vld [vmem:[%s16 + $0x5c] sm:$0xf]
    %v2461 = vld [vmem:[%s16 + $0x60] sm:$0xf]
    %v2462 = vld [vmem:[%s16 + $0x64] sm:$0xf]
    %v2463 = vld [vmem:[%s16 + $0x68] sm:$0xf]
    %v2464 = vld [vmem:[%s16 + $0x6c] sm:$0xf]
    %v2465 = vld [vmem:[%s16 + $0x70] sm:$0xf]
    %v2466 = vld [vmem:[%s16 + $0x74] sm:$0xf]
    %v2467 = vld [vmem:[%s16 + $0x78] sm:$0xf]
    %v2468 = vld [vmem:[%s16 + $0x7c] sm:$0xf]
    %v2469 = vld [vmem:[%s17] sm:$0x1]
    %v2471 = vlaneseq
    %v2472 = vshrl.u32 %v2471, 7
    %v2473 = vsub.s32 0, %v2472
    %v2474 = vrot.slane %v2469, %v2473
    %v2508 = vunpack.c.l.b16 %v2437
    %v2509 = vunpack.c.l.b16 %v2438
    %v2510 = vunpack.c.l.b16 %v2439
    %v2511 = vunpack.c.l.b16 %v2440
    %v2512 = vunpack.c.l.b16 %v2441
    %v2513 = vunpack.c.l.b16 %v2442
    %v2514 = vunpack.c.l.b16 %v2443
    %v2515 = vunpack.c.l.b16 %v2444
    %v2516 = vunpack.c.l.b16 %v2445
    %v2517 = vunpack.c.l.b16 %v2446
    %v2518 = vunpack.c.l.b16 %v2447
    %v2519 = vunpack.c.l.b16 %v2448
    %v2520 = vunpack.c.l.b16 %v2449
    %v2521 = vunpack.c.l.b16 %v2450
    %v2522 = vunpack.c.l.b16 %v2451
    %v2523 = vunpack.c.l.b16 %v2452
    %v2524 = vunpack.c.l.b16 %v2453
    %v2525 = vunpack.c.l.b16 %v2454
    %v2526 = vunpack.c.l.b16 %v2455
    %v2527 = vunpack.c.l.b16 %v2456
    %v2528 = vunpack.c.l.b16 %v2457
    %v2529 = vunpack.c.l.b16 %v2458
    %v2530 = vunpack.c.l.b16 %v2459
    %v2531 = vunpack.c.l.b16 %v2460
    %v2532 = vunpack.c.l.b16 %v2461
    %v2533 = vunpack.c.l.b16 %v2462
    %v2534 = vunpack.c.l.b16 %v2463
    %v2535 = vunpack.c.l.b16 %v2464
    %v2536 = vunpack.c.l.b16 %v2465
    %v2537 = vunpack.c.l.b16 %v2466
    %v2538 = vunpack.c.l.b16 %v2467
    %v2539 = vunpack.c.l.b16 %v2468
    %v2540 = vpack.c.b16 %v2509, %v2508
    %v2541 = vpack.c.b16 %v2511, %v2510
    %v2542 = vpack.c.b16 %v2513, %v2512
    %v2543 = vpack.c.b16 %v2515, %v2514
    %v2544 = vpack.c.b16 %v2517, %v2516
    %v2545 = vpack.c.b16 %v2519, %v2518
    %v2546 = vpack.c.b16 %v2521, %v2520
    %v2547 = vpack.c.b16 %v2523, %v2522
    %v2548 = vpack.c.b16 %v2525, %v2524
    %v2549 = vpack.c.b16 %v2527, %v2526
    %v2550 = vpack.c.b16 %v2529, %v2528
    %v2551 = vpack.c.b16 %v2531, %v2530
    %v2552 = vpack.c.b16 %v2533, %v2532
    %v2553 = vpack.c.b16 %v2535, %v2534
    %v2554 = vpack.c.b16 %v2537, %v2536
    %v2555 = vpack.c.b16 %v2539, %v2538
    %2572 = vmatprep.subr.bf16.mxu0 0
    %2573 = vmatpush1.bf16.msra.mxu0 %v2540
    %2574 = vmatprep.subr.bf16.mxu0 0
    %2575 = vmatpush1.bf16.msra.mxu0 %v2541
    %2576 = vmatprep.subr.bf16.mxu0 0
    %2577 = vmatpush1.bf16.msra.mxu0 %v2542
    %2578 = vmatprep.subr.bf16.mxu0 0
    %2579 = vmatpush1.bf16.msra.mxu0 %v2543
    %2580 = vmatprep.subr.bf16.mxu0 0
    %2581 = vmatpush1.bf16.msra.mxu0 %v2544
    %2582 = vmatprep.subr.bf16.mxu0 0
    %2583 = vmatpush1.bf16.msra.mxu0 %v2545
    %2584 = vmatprep.subr.bf16.mxu0 0
    %2585 = vmatpush1.bf16.msra.mxu0 %v2546
    %2586 = vmatprep.subr.bf16.mxu0 0
    %2587 = vmatpush1.bf16.msra.mxu0 %v2547
    %2588 = vmatprep.subr.bf16.mxu0 0
    %2589 = vmatpush1.bf16.msra.mxu0 %v2548
    %2590 = vmatprep.subr.bf16.mxu0 0
    %2591 = vmatpush1.bf16.msra.mxu0 %v2549
    %2592 = vmatprep.subr.bf16.mxu0 0
    %2593 = vmatpush1.bf16.msra.mxu0 %v2550
    %2594 = vmatprep.subr.bf16.mxu0 0
    %2595 = vmatpush1.bf16.msra.mxu0 %v2551
    %2596 = vmatprep.subr.bf16.mxu0 0
    %2597 = vmatpush1.bf16.msra.mxu0 %v2552
    %2598 = vmatprep.subr.bf16.mxu0 0
    %2599 = vmatpush1.bf16.msra.mxu0 %v2553
    %2600 = vmatprep.subr.bf16.mxu0 0
    %2601 = vmatpush1.bf16.msra.mxu0 %v2554
    %2602 = vmatprep.subr.bf16.mxu0 0
    %2603 = vmatpush1.bf16.msra.mxu0 %v2555
    %2604 = vmatprep.mubr.bf16.mxu0 %v2436
    %2605 = vmatmul.mubr.bf16.gmra.mrb[0].mxu0 %v2435
    %v2606 = vpop.f32.mrb[0].mxu0
    %v2607 = vadd.f32 %v2474, %v2606
    %v2608 = vpop.f32.mrb[0].mxu0
    %v2609 = vpop.f32.mrb[0].mxu0
    %v2610 = vpop.f32.mrb[0].mxu0
    %2611 = vdwg.mxu0
    %vm2612 = vcmask 15360
    %2613 = vst.msk [vmem:[%s18] sm:$0xff] %vm2612, %v2607
    %v2614 = vsel %vm2612, %v2607, -inf
    %2615 = vmax.xlane.f32.xlu0 %v2614
    %v2616 = vpop.xlane.xlu0 %2615
    %v2617 = vsub.f32 %v2607, %v2616
    %v2618 = vmul.f32 %v2617, 1.442695
    %v2619 = vpow.pop %v2618
    %v2620 = vsel %vm2612, %v2619, 0.0
    %2621 = vadd.xlane.f32.xlu0 %v2620
    %v2622 = vpop.xlane.xlu0 %2621
    %v2623 = vrcp.pop %v2622
    %v2624 = vmul.f32 %v2619, %v2623
    %2625 = vst.msk [vmem:[%s19] sm:$0xff] %vm2612, %v2624
    // Predicated region
    $region94: #{tpu_custom_call.1} parent=1 // pred_check
      _
    $region95: #{tpu_custom_call.1} parent=1 // pred_check_branch
      %2627 = sbr.rel (0) target = $region97
    $region96: #{tpu_custom_call.1} parent=1 // pred_region
      _
    $region97: #{tpu_custom_call.1} parent=1 // pred_fallthru
      _
    // Predicated region
    $region98: #{tpu_custom_call.1} parent=1 // pred_check
      _
    $region99: #{tpu_custom_call.1} parent=1 // pred_check_branch
      %2629 = sbr.rel (0) target = $region101
    $region100: #{tpu_custom_call.1} parent=1 // pred_region
      _
    $region101: #{tpu_custom_call.1} parent=1 // pred_fallthru
      _
    // Predicated region
    $region102: #{tpu_custom_call.1} parent=1 // pred_check
      _
    $region103: #{tpu_custom_call.1} parent=1 // pred_check_branch
      %2631 = sbr.rel (0) target = $region105
    $region104: #{tpu_custom_call.1} parent=1 // pred_region
      _
    $region105: #{tpu_custom_call.1} parent=1 // pred_fallthru
      _
    // Predicated region
    $region106: #{tpu_custom_call.1} parent=1 // pred_check
      _
    $region107: #{tpu_custom_call.1} parent=1 // pred_check_branch
      %2633 = sbr.rel (0) target = $region109
    $region108: #{tpu_custom_call.1} parent=1 // pred_region
      _
    $region109: #{tpu_custom_call.1} parent=1 // pred_fallthru
      _
    %2634 = vsyncpa [#allocation3], 1
    %2635 = vsyncpa [#allocation5], 1
    %2636 = vsyncpa [#allocation8], 1

</llo_original>
